<compile_context>
chip_gen: v6e
topology: v6e:2x2x1
jax: 0.10.0
libtpu: 0.0.40
codegen_flags: <defaults>
</compile_context>

<pallas_src>
import jax
import jax.numpy as jnp
from jax.experimental import pallas as pl
from jax.experimental.pallas import tpu as pltpu


def _recurrent_vae_kernel(
    x_ref,      # (B, T*I)     batch-first input, time flattened into lanes
    eps_ref,    # (B, L)       N(0,1) reparameterization noise
    eiw_ref,    # (T*I, T*4H)  kron(I_T, enc W_ih^T), gate order (i,f,o,g)
    eib_ref,    # (1, T*4H)    tiled encoder bias (b_ih + b_hh)
    ehh_ref,    # (H, 4H)      encoder W_hh^T, gate order (i,f,o,g)
    w21_ref,    # (H, L)       fc21 W^T
    b21_ref,    # (1, L)
    w22_ref,    # (H, L)       fc22 W^T
    b22_ref,    # (1, L)
    w3_ref,     # (L, T*H)     fc3 W^T
    b3_ref,     # (1, T*H)
    diw_ref,    # (T*H, T*4I)  kron(I_T, dec W_ih^T), gate order (i,f,o,g)
    dib_ref,    # (1, T*4I)    tiled decoder bias
    dhh_ref,    # (I, 4I)      decoder W_hh^T, gate order (i,f,o,g)
    y_ref,      # (B, T*I)     sigmoid(decoder hidden), lane-dense output
    kl_ref,     # (1, 1)       KL value (the `self.kl` side effect of forward())
):
    B = x_ref.shape[0]
    H = ehh_ref.shape[0]
    I = dhh_ref.shape[0]
    T = x_ref.shape[1] // I
    f32 = jnp.float32

    # ----- encoder: ALL T input projections in one MXU op (hoisted) ---------
    pre_e = (jnp.dot(x_ref[...], eiw_ref[...], preferred_element_type=f32)
             + eib_ref[...])                                   # (B, T*4H)

    ehh = ehh_ref[...]
    h = jnp.zeros((B, H), f32)
    c = jnp.zeros((B, H), f32)
    Ge = 4 * H
    # T is small & static -> fully unrolled.  (For long T switch to
    # lax.fori_loop(..., unroll=True) to bound vreg live ranges.)
    for t in range(T):
        gates = pre_e[:, t * Ge:(t + 1) * Ge] + jnp.dot(
            h, ehh, preferred_element_type=f32)                # (B, 4H)
        sig = jax.nn.sigmoid(gates[:, :3 * H])                 # i | f | o in one pass
        g_g = jnp.tanh(gates[:, 3 * H:])
        c = sig[:, H:2 * H] * c + sig[:, :H] * g_g
        h = sig[:, 2 * H:3 * H] * jnp.tanh(c)

    # ----- latent heads + reparameterize + KL -------------------------------
    mu = jnp.dot(h, w21_ref[...], preferred_element_type=f32) + b21_ref[...]
    sigma = jnp.dot(h, w22_ref[...], preferred_element_type=f32) + b22_ref[...]
    z = mu + sigma * eps_ref[...]                              # (B, L)

    kl_vals = sigma * sigma + mu * mu - jnp.log(sigma * sigma) - 1.0
    kl_ref[...] = 0.5 * jnp.sum(jnp.sum(kl_vals, axis=1, keepdims=True),
                                axis=0, keepdims=True)

    # ----- decoder: fc3+relu, then ALL T input projections in one MXU op ----
    h3 = jnp.maximum(
        jnp.dot(z, w3_ref[...], preferred_element_type=f32) + b3_ref[...], 0.0)
    pre_d = (jnp.dot(h3, diw_ref[...], preferred_element_type=f32)
             + dib_ref[...])                                   # (B, T*4I)

    dhh_rows = [dhh_ref[i:i + 1, :] for i in range(I)]         # hoisted (1,4I) rows
    hd = jnp.zeros((B, I), f32)
    cd = jnp.zeros((B, I), f32)
    Gd = 4 * I
    hs = []
    for t in range(T):
        gates = pre_d[:, t * Gd:(t + 1) * Gd]
        # recurrent term hd @ W_hh^T on the VPU (depth-I contraction; no MXU).
        for i in range(I):
            gates = gates + hd[:, i:i + 1] * dhh_rows[i]
        sig = jax.nn.sigmoid(gates[:, :3 * I])
        g_g = jnp.tanh(gates[:, 3 * I:])
        cd = sig[:, I:2 * I] * cd + sig[:, :I] * g_g
        hd = sig[:, 2 * I:3 * I] * jnp.tanh(cd)
        hs.append(hd)

    # one sigmoid over all timesteps + single lane-dense store
    y_ref[...] = jax.nn.sigmoid(jnp.concatenate(hs, axis=1))   # (B, T*I)


# --------------------------------------------------------------------------
# Host-side parameter preparation (done ONCE, outside the jitted forward).
# --------------------------------------------------------------------------
def _reorder_gates(w):
    """PyTorch packed gate order (i, f, g, o) -> (i, f, o, g) along axis 1."""
    i, f, g, o = jnp.split(w, 4, axis=1)
    return jnp.concatenate([i, f, o, g], axis=1)


def prepare_params(params, seq_len):
    """Reorder gates, build block-diagonal hoisted input-projection weights."""
    T = seq_len
    e_ih = _reorder_gates(params["enc_w_ih"])     # (I, 4H)
    e_hh = _reorder_gates(params["enc_w_hh"])     # (H, 4H)
    e_b = _reorder_gates(params["enc_b"])         # (1, 4H)
    d_ih = _reorder_gates(params["dec_w_ih"])     # (H, 4I)
    d_hh = _reorder_gates(params["dec_w_hh"])     # (I, 4I)
    d_b = _reorder_gates(params["dec_b"])         # (1, 4I)
    eye_t = jnp.eye(T, dtype=jnp.float32)
    return dict(
        enc_in_w=jnp.kron(eye_t, e_ih),           # (T*I, T*4H)
        enc_in_b=jnp.tile(e_b, (1, T)),           # (1, T*4H)
        enc_w_hh=e_hh,
        w21=params["w21"], b21=params["b21"],
        w22=params["w22"], b22=params["b22"],
        w3=params["w3"], b3=params["b3"],
        dec_in_w=jnp.kron(eye_t, d_ih),           # (T*H, T*4I)
        dec_in_b=jnp.tile(d_b, (1, T)),           # (1, T*4I)
        dec_w_hh=d_hh,
    )


def recurrent_vae_forward(x, eps, kparams):
    """x: (B, T, input_size) batch-first (PyTorch convention). Returns (y, kl)."""
    B, T, I = x.shape
    x2 = x.reshape(B, T * I)                      # free metadata reshape, no transpose

    vmem = pl.BlockSpec(memory_space=pltpu.MemorySpace.VMEM)
    args = (
        x2, eps,
        kparams["enc_in_w"], kparams["enc_in_b"], kparams["enc_w_hh"],
        kparams["w21"], kparams["b21"], kparams["w22"], kparams["b22"],
        kparams["w3"], kparams["b3"],
        kparams["dec_in_w"], kparams["dec_in_b"], kparams["dec_w_hh"],
    )
    y2, kl = pl.pallas_call(
        _recurrent_vae_kernel,
        out_shape=(
            jax.ShapeDtypeStruct((B, T * I), jnp.float32),
            jax.ShapeDtypeStruct((1, 1), jnp.float32),
        ),
        in_specs=[vmem] * len(args),
        out_specs=(vmem, vmem),
    )(*args)
    # TODO(synk): if batch grows, add a batch grid with
    # dimension_semantics=("parallel",) so v7x's second TensorCore gets work.
    return y2.reshape(B, T, I), kl[0, 0]


def init_params(key, input_size, latent_size, hidden_size, seq_len):
    """Deterministic synthetic parameters with the module's declared shapes,
    stored pre-transposed as W^T, gates in PyTorch order (i, f, g, o)."""
    I, L, H, T = input_size, latent_size, hidden_size, seq_len
    ks = jax.random.split(key, 12)

    def uni(k, shape, fan):
        bound = 1.0 / jnp.sqrt(jnp.float32(fan))
        return jax.random.uniform(k, shape, jnp.float32, -bound, bound)

    return dict(
        enc_w_ih=uni(ks[0], (I, 4 * H), H),
        enc_w_hh=uni(ks[1], (H, 4 * H), H),
        enc_b=uni(ks[2], (1, 4 * H), H),          # b_ih + b_hh folded together
        w21=uni(ks[3], (H, L), H),
        b21=uni(ks[4], (1, L), H),
        w22=uni(ks[5], (H, L), H),
        b22=uni(ks[6], (1, L), H),
        w3=uni(ks[7], (L, H * T), L),
        b3=uni(ks[8], (1, H * T), L),
        dec_w_ih=uni(ks[9], (H, 4 * I), I),
        dec_w_hh=uni(ks[10], (I, 4 * I), I),
        dec_b=uni(ks[11], (1, 4 * I), I),
    )


def reference_forward(x, eps, params):
    """Pure-JAX reference (same math, no Pallas, PyTorch gate order)."""
    B, T, I = x.shape
    H = params["enc_w_hh"].shape[0]

    def cell(x_t, h, c, w_ih, w_hh, b, n):
        g = x_t @ w_ih + h @ w_hh + b
        i = jax.nn.sigmoid(g[:, :n])
        f = jax.nn.sigmoid(g[:, n:2 * n])
        gg = jnp.tanh(g[:, 2 * n:3 * n])
        o = jax.nn.sigmoid(g[:, 3 * n:])
        c = f * c + i * gg
        return o * jnp.tanh(c), c

    h = jnp.zeros((B, H), jnp.float32)
    c = jnp.zeros((B, H), jnp.float32)
    for t in range(T):
        h, c = cell(x[:, t], h, c,
                    params["enc_w_ih"], params["enc_w_hh"], params["enc_b"], H)
    mu = h @ params["w21"] + params["b21"]
    sigma = h @ params["w22"] + params["b22"]
    z = mu + sigma * eps
    kl = 0.5 * jnp.sum(sigma**2 + mu**2 - jnp.log(sigma**2) - 1.0)
    h3 = jax.nn.relu(z @ params["w3"] + params["b3"]).reshape(B, T, H)
    hd = jnp.zeros((B, I), jnp.float32)
    cd = jnp.zeros((B, I), jnp.float32)
    ys = []
    for t in range(T):
        hd, cd = cell(h3[:, t], hd, cd,
                      params["dec_w_ih"], params["dec_w_hh"], params["dec_b"], I)
        ys.append(jax.nn.sigmoid(hd))
    return jnp.stack(ys, axis=1), kl


if __name__ == "__main__":
    BATCH, SEQ = 2, 8
    INPUT_SIZE, LATENT_SIZE, HIDDEN_SIZE = 4, 16, 32

    key = jax.random.PRNGKey(0)
    kx, keps, kp = jax.random.split(key, 3)
    x = jax.random.normal(kx, (BATCH, SEQ, INPUT_SIZE), jnp.float32)
    # N(0, I_latent) reparameterization sample (RNG done host-side, fed in)
    eps = jax.random.normal(keps, (BATCH, LATENT_SIZE), jnp.float32)
    params = init_params(kp, INPUT_SIZE, LATENT_SIZE, HIDDEN_SIZE, SEQ)
    kparams = prepare_params(params, SEQ)     # once, outside the jitted forward

    y, kl = jax.jit(recurrent_vae_forward)(x, eps, kparams)
    jax.block_until_ready((y, kl))

    y_ref, kl_ref = reference_forward(x, eps, params)
    assert y.shape == (BATCH, SEQ, INPUT_SIZE), y.shape
    assert jnp.allclose(y, y_ref, atol=1e-2, rtol=1e-2)
    assert jnp.allclose(kl, kl_ref, atol=1e-2, rtol=1e-2)
    print("KERNEL_OK")
</pallas_src>

<mosaic_0001>
module attributes {stable_mosaic.version = 11 : i64} {
  func.func @_recurrent_vae_kernel(%arg0: memref<2x32xf32, #tpu.memory_space<vmem>>, %arg1: memref<2x16xf32, #tpu.memory_space<vmem>>, %arg2: memref<32x1024xf32, #tpu.memory_space<vmem>>, %arg3: memref<1x1024xf32, #tpu.memory_space<vmem>>, %arg4: memref<32x128xf32, #tpu.memory_space<vmem>>, %arg5: memref<32x16xf32, #tpu.memory_space<vmem>>, %arg6: memref<1x16xf32, #tpu.memory_space<vmem>>, %arg7: memref<32x16xf32, #tpu.memory_space<vmem>>, %arg8: memref<1x16xf32, #tpu.memory_space<vmem>>, %arg9: memref<16x256xf32, #tpu.memory_space<vmem>>, %arg10: memref<1x256xf32, #tpu.memory_space<vmem>>, %arg11: memref<256x128xf32, #tpu.memory_space<vmem>>, %arg12: memref<1x128xf32, #tpu.memory_space<vmem>>, %arg13: memref<4x16xf32, #tpu.memory_space<vmem>>, %arg14: memref<2x32xf32, #tpu.memory_space<vmem>>, %arg15: memref<1x1xf32, #tpu.memory_space<vmem>>) attributes {dimension_semantics = [], scalar_prefetch = 0 : i64, scratch_operands = 0 : i64, tpu.core_type = #tpu.core_type<tc>} {
    %c0 = arith.constant 0 : index
    %c0_0 = arith.constant 0 : index
    %0 = vector.load %arg0[%c0, %c0_0] : memref<2x32xf32, #tpu.memory_space<vmem>>, vector<2x32xf32>
    %c0_1 = arith.constant 0 : index
    %c0_2 = arith.constant 0 : index
    %1 = vector.load %arg2[%c0_1, %c0_2] : memref<32x1024xf32, #tpu.memory_space<vmem>>, vector<32x1024xf32>
    %cst = arith.constant dense<0.000000e+00> : vector<2x1024xf32>
    %2 = tpu.matmul %0, %1, %cst {dimension_numbers = #tpu.dot_dimension_numbers<[1], [0], [0], [1], [0, 0, 1, 1], [], []>} : vector<2x32xf32>, vector<32x1024xf32>, vector<2x1024xf32> -> vector<2x1024xf32>
    %c0_3 = arith.constant 0 : index
    %c0_4 = arith.constant 0 : index
    %3 = vector.load %arg3[%c0_3, %c0_4] : memref<1x1024xf32, #tpu.memory_space<vmem>>, vector<1x1024xf32>
    %4 = vector.broadcast %3 : vector<1x1024xf32> to vector<2x1024xf32>
    %5 = arith.addf %2, %4 : vector<2x1024xf32>
    %c0_5 = arith.constant 0 : index
    %c0_6 = arith.constant 0 : index
    %6 = vector.load %arg4[%c0_5, %c0_6] : memref<32x128xf32, #tpu.memory_space<vmem>>, vector<32x128xf32>
    %cst_7 = arith.constant 0.000000e+00 : f32
    %7 = vector.broadcast %cst_7 : f32 to vector<2x32xf32>
    %cst_8 = arith.constant 0.000000e+00 : f32
    %8 = vector.broadcast %cst_8 : f32 to vector<2x32xf32>
    %9 = vector.extract_strided_slice %5 {offsets = [0, 0], sizes = [2, 128], strides = [1, 1]} : vector<2x1024xf32> to vector<2x128xf32>
    %cst_9 = arith.constant dense<0.000000e+00> : vector<2x128xf32>
    %10 = tpu.matmul %7, %6, %cst_9 {dimension_numbers = #tpu.dot_dimension_numbers<[1], [0], [0], [1], [0, 0, 1, 1], [], []>} : vector<2x32xf32>, vector<32x128xf32>, vector<2x128xf32> -> vector<2x128xf32>
    %11 = arith.addf %9, %10 : vector<2x128xf32>
    %12 = vector.extract_strided_slice %11 {offsets = [0, 0], sizes = [2, 96], strides = [1, 1]} : vector<2x128xf32> to vector<2x96xf32>
    %13 = arith.negf %12 : vector<2x96xf32>
    %14 = math.exp %13 : vector<2x96xf32>
    %cst_10 = arith.constant 1.000000e+00 : f32
    %15 = vector.broadcast %cst_10 : f32 to vector<2x96xf32>
    %16 = arith.addf %15, %14 : vector<2x96xf32>
    %17 = arith.divf %15, %16 : vector<2x96xf32>
    %18 = vector.extract_strided_slice %11 {offsets = [0, 96], sizes = [2, 32], strides = [1, 1]} : vector<2x128xf32> to vector<2x32xf32>
    %19 = math.tanh %18 : vector<2x32xf32>
    %20 = vector.extract_strided_slice %17 {offsets = [0, 32], sizes = [2, 32], strides = [1, 1]} : vector<2x96xf32> to vector<2x32xf32>
    %21 = arith.mulf %20, %8 : vector<2x32xf32>
    %22 = vector.extract_strided_slice %17 {offsets = [0, 0], sizes = [2, 32], strides = [1, 1]} : vector<2x96xf32> to vector<2x32xf32>
    %23 = arith.mulf %22, %19 : vector<2x32xf32>
    %24 = arith.addf %21, %23 : vector<2x32xf32>
    %25 = vector.extract_strided_slice %17 {offsets = [0, 64], sizes = [2, 32], strides = [1, 1]} : vector<2x96xf32> to vector<2x32xf32>
    %26 = math.tanh %24 : vector<2x32xf32>
    %27 = arith.mulf %25, %26 : vector<2x32xf32>
    %28 = vector.extract_strided_slice %5 {offsets = [0, 128], sizes = [2, 128], strides = [1, 1]} : vector<2x1024xf32> to vector<2x128xf32>
    %cst_11 = arith.constant dense<0.000000e+00> : vector<2x128xf32>
    %29 = tpu.matmul %27, %6, %cst_11 {dimension_numbers = #tpu.dot_dimension_numbers<[1], [0], [0], [1], [0, 0, 1, 1], [], []>} : vector<2x32xf32>, vector<32x128xf32>, vector<2x128xf32> -> vector<2x128xf32>
    %30 = arith.addf %28, %29 : vector<2x128xf32>
    %31 = vector.extract_strided_slice %30 {offsets = [0, 0], sizes = [2, 96], strides = [1, 1]} : vector<2x128xf32> to vector<2x96xf32>
    %32 = arith.negf %31 : vector<2x96xf32>
    %33 = math.exp %32 : vector<2x96xf32>
    %cst_12 = arith.constant 1.000000e+00 : f32
    %34 = vector.broadcast %cst_12 : f32 to vector<2x96xf32>
    %35 = arith.addf %34, %33 : vector<2x96xf32>
    %36 = arith.divf %34, %35 : vector<2x96xf32>
    %37 = vector.extract_strided_slice %30 {offsets = [0, 96], sizes = [2, 32], strides = [1, 1]} : vector<2x128xf32> to vector<2x32xf32>
    %38 = math.tanh %37 : vector<2x32xf32>
    %39 = vector.extract_strided_slice %36 {offsets = [0, 32], sizes = [2, 32], strides = [1, 1]} : vector<2x96xf32> to vector<2x32xf32>
    %40 = arith.mulf %39, %24 : vector<2x32xf32>
    %41 = vector.extract_strided_slice %36 {offsets = [0, 0], sizes = [2, 32], strides = [1, 1]} : vector<2x96xf32> to vector<2x32xf32>
    %42 = arith.mulf %41, %38 : vector<2x32xf32>
    %43 = arith.addf %40, %42 : vector<2x32xf32>
    %44 = vector.extract_strided_slice %36 {offsets = [0, 64], sizes = [2, 32], strides = [1, 1]} : vector<2x96xf32> to vector<2x32xf32>
    %45 = math.tanh %43 : vector<2x32xf32>
    %46 = arith.mulf %44, %45 : vector<2x32xf32>
    %47 = vector.extract_strided_slice %5 {offsets = [0, 256], sizes = [2, 128], strides = [1, 1]} : vector<2x1024xf32> to vector<2x128xf32>
    %cst_13 = arith.constant dense<0.000000e+00> : vector<2x128xf32>
    %48 = tpu.matmul %46, %6, %cst_13 {dimension_numbers = #tpu.dot_dimension_numbers<[1], [0], [0], [1], [0, 0, 1, 1], [], []>} : vector<2x32xf32>, vector<32x128xf32>, vector<2x128xf32> -> vector<2x128xf32>
    %49 = arith.addf %47, %48 : vector<2x128xf32>
    %50 = vector.extract_strided_slice %49 {offsets = [0, 0], sizes = [2, 96], strides = [1, 1]} : vector<2x128xf32> to vector<2x96xf32>
    %51 = arith.negf %50 : vector<2x96xf32>
    %52 = math.exp %51 : vector<2x96xf32>
    %cst_14 = arith.constant 1.000000e+00 : f32
    %53 = vector.broadcast %cst_14 : f32 to vector<2x96xf32>
    %54 = arith.addf %53, %52 : vector<2x96xf32>
    %55 = arith.divf %53, %54 : vector<2x96xf32>
    %56 = vector.extract_strided_slice %49 {offsets = [0, 96], sizes = [2, 32], strides = [1, 1]} : vector<2x128xf32> to vector<2x32xf32>
    %57 = math.tanh %56 : vector<2x32xf32>
    %58 = vector.extract_strided_slice %55 {offsets = [0, 32], sizes = [2, 32], strides = [1, 1]} : vector<2x96xf32> to vector<2x32xf32>
    %59 = arith.mulf %58, %43 : vector<2x32xf32>
    %60 = vector.extract_strided_slice %55 {offsets = [0, 0], sizes = [2, 32], strides = [1, 1]} : vector<2x96xf32> to vector<2x32xf32>
    %61 = arith.mulf %60, %57 : vector<2x32xf32>
    %62 = arith.addf %59, %61 : vector<2x32xf32>
    %63 = vector.extract_strided_slice %55 {offsets = [0, 64], sizes = [2, 32], strides = [1, 1]} : vector<2x96xf32> to vector<2x32xf32>
    %64 = math.tanh %62 : vector<2x32xf32>
    %65 = arith.mulf %63, %64 : vector<2x32xf32>
    %66 = vector.extract_strided_slice %5 {offsets = [0, 384], sizes = [2, 128], strides = [1, 1]} : vector<2x1024xf32> to vector<2x128xf32>
    %cst_15 = arith.constant dense<0.000000e+00> : vector<2x128xf32>
    %67 = tpu.matmul %65, %6, %cst_15 {dimension_numbers = #tpu.dot_dimension_numbers<[1], [0], [0], [1], [0, 0, 1, 1], [], []>} : vector<2x32xf32>, vector<32x128xf32>, vector<2x128xf32> -> vector<2x128xf32>
    %68 = arith.addf %66, %67 : vector<2x128xf32>
    %69 = vector.extract_strided_slice %68 {offsets = [0, 0], sizes = [2, 96], strides = [1, 1]} : vector<2x128xf32> to vector<2x96xf32>
    %70 = arith.negf %69 : vector<2x96xf32>
    %71 = math.exp %70 : vector<2x96xf32>
    %cst_16 = arith.constant 1.000000e+00 : f32
    %72 = vector.broadcast %cst_16 : f32 to vector<2x96xf32>
    %73 = arith.addf %72, %71 : vector<2x96xf32>
    %74 = arith.divf %72, %73 : vector<2x96xf32>
    %75 = vector.extract_strided_slice %68 {offsets = [0, 96], sizes = [2, 32], strides = [1, 1]} : vector<2x128xf32> to vector<2x32xf32>
    %76 = math.tanh %75 : vector<2x32xf32>
    %77 = vector.extract_strided_slice %74 {offsets = [0, 32], sizes = [2, 32], strides = [1, 1]} : vector<2x96xf32> to vector<2x32xf32>
    %78 = arith.mulf %77, %62 : vector<2x32xf32>
    %79 = vector.extract_strided_slice %74 {offsets = [0, 0], sizes = [2, 32], strides = [1, 1]} : vector<2x96xf32> to vector<2x32xf32>
    %80 = arith.mulf %79, %76 : vector<2x32xf32>
    %81 = arith.addf %78, %80 : vector<2x32xf32>
    %82 = vector.extract_strided_slice %74 {offsets = [0, 64], sizes = [2, 32], strides = [1, 1]} : vector<2x96xf32> to vector<2x32xf32>
    %83 = math.tanh %81 : vector<2x32xf32>
    %84 = arith.mulf %82, %83 : vector<2x32xf32>
    %85 = vector.extract_strided_slice %5 {offsets = [0, 512], sizes = [2, 128], strides = [1, 1]} : vector<2x1024xf32> to vector<2x128xf32>
    %cst_17 = arith.constant dense<0.000000e+00> : vector<2x128xf32>
    %86 = tpu.matmul %84, %6, %cst_17 {dimension_numbers = #tpu.dot_dimension_numbers<[1], [0], [0], [1], [0, 0, 1, 1], [], []>} : vector<2x32xf32>, vector<32x128xf32>, vector<2x128xf32> -> vector<2x128xf32>
    %87 = arith.addf %85, %86 : vector<2x128xf32>
    %88 = vector.extract_strided_slice %87 {offsets = [0, 0], sizes = [2, 96], strides = [1, 1]} : vector<2x128xf32> to vector<2x96xf32>
    %89 = arith.negf %88 : vector<2x96xf32>
    %90 = math.exp %89 : vector<2x96xf32>
    %cst_18 = arith.constant 1.000000e+00 : f32
    %91 = vector.broadcast %cst_18 : f32 to vector<2x96xf32>
    %92 = arith.addf %91, %90 : vector<2x96xf32>
    %93 = arith.divf %91, %92 : vector<2x96xf32>
    %94 = vector.extract_strided_slice %87 {offsets = [0, 96], sizes = [2, 32], strides = [1, 1]} : vector<2x128xf32> to vector<2x32xf32>
    %95 = math.tanh %94 : vector<2x32xf32>
    %96 = vector.extract_strided_slice %93 {offsets = [0, 32], sizes = [2, 32], strides = [1, 1]} : vector<2x96xf32> to vector<2x32xf32>
    %97 = arith.mulf %96, %81 : vector<2x32xf32>
    %98 = vector.extract_strided_slice %93 {offsets = [0, 0], sizes = [2, 32], strides = [1, 1]} : vector<2x96xf32> to vector<2x32xf32>
    %99 = arith.mulf %98, %95 : vector<2x32xf32>
    %100 = arith.addf %97, %99 : vector<2x32xf32>
    %101 = vector.extract_strided_slice %93 {offsets = [0, 64], sizes = [2, 32], strides = [1, 1]} : vector<2x96xf32> to vector<2x32xf32>
    %102 = math.tanh %100 : vector<2x32xf32>
    %103 = arith.mulf %101, %102 : vector<2x32xf32>
    %104 = vector.extract_strided_slice %5 {offsets = [0, 640], sizes = [2, 128], strides = [1, 1]} : vector<2x1024xf32> to vector<2x128xf32>
    %cst_19 = arith.constant dense<0.000000e+00> : vector<2x128xf32>
    %105 = tpu.matmul %103, %6, %cst_19 {dimension_numbers = #tpu.dot_dimension_numbers<[1], [0], [0], [1], [0, 0, 1, 1], [], []>} : vector<2x32xf32>, vector<32x128xf32>, vector<2x128xf32> -> vector<2x128xf32>
    %106 = arith.addf %104, %105 : vector<2x128xf32>
    %107 = vector.extract_strided_slice %106 {offsets = [0, 0], sizes = [2, 96], strides = [1, 1]} : vector<2x128xf32> to vector<2x96xf32>
    %108 = arith.negf %107 : vector<2x96xf32>
    %109 = math.exp %108 : vector<2x96xf32>
    %cst_20 = arith.constant 1.000000e+00 : f32
    %110 = vector.broadcast %cst_20 : f32 to vector<2x96xf32>
    %111 = arith.addf %110, %109 : vector<2x96xf32>
    %112 = arith.divf %110, %111 : vector<2x96xf32>
    %113 = vector.extract_strided_slice %106 {offsets = [0, 96], sizes = [2, 32], strides = [1, 1]} : vector<2x128xf32> to vector<2x32xf32>
    %114 = math.tanh %113 : vector<2x32xf32>
    %115 = vector.extract_strided_slice %112 {offsets = [0, 32], sizes = [2, 32], strides = [1, 1]} : vector<2x96xf32> to vector<2x32xf32>
    %116 = arith.mulf %115, %100 : vector<2x32xf32>
    %117 = vector.extract_strided_slice %112 {offsets = [0, 0], sizes = [2, 32], strides = [1, 1]} : vector<2x96xf32> to vector<2x32xf32>
    %118 = arith.mulf %117, %114 : vector<2x32xf32>
    %119 = arith.addf %116, %118 : vector<2x32xf32>
    %120 = vector.extract_strided_slice %112 {offsets = [0, 64], sizes = [2, 32], strides = [1, 1]} : vector<2x96xf32> to vector<2x32xf32>
    %121 = math.tanh %119 : vector<2x32xf32>
    %122 = arith.mulf %120, %121 : vector<2x32xf32>
    %123 = vector.extract_strided_slice %5 {offsets = [0, 768], sizes = [2, 128], strides = [1, 1]} : vector<2x1024xf32> to vector<2x128xf32>
    %cst_21 = arith.constant dense<0.000000e+00> : vector<2x128xf32>
    %124 = tpu.matmul %122, %6, %cst_21 {dimension_numbers = #tpu.dot_dimension_numbers<[1], [0], [0], [1], [0, 0, 1, 1], [], []>} : vector<2x32xf32>, vector<32x128xf32>, vector<2x128xf32> -> vector<2x128xf32>
    %125 = arith.addf %123, %124 : vector<2x128xf32>
    %126 = vector.extract_strided_slice %125 {offsets = [0, 0], sizes = [2, 96], strides = [1, 1]} : vector<2x128xf32> to vector<2x96xf32>
    %127 = arith.negf %126 : vector<2x96xf32>
    %128 = math.exp %127 : vector<2x96xf32>
    %cst_22 = arith.constant 1.000000e+00 : f32
    %129 = vector.broadcast %cst_22 : f32 to vector<2x96xf32>
    %130 = arith.addf %129, %128 : vector<2x96xf32>
    %131 = arith.divf %129, %130 : vector<2x96xf32>
    %132 = vector.extract_strided_slice %125 {offsets = [0, 96], sizes = [2, 32], strides = [1, 1]} : vector<2x128xf32> to vector<2x32xf32>
    %133 = math.tanh %132 : vector<2x32xf32>
    %134 = vector.extract_strided_slice %131 {offsets = [0, 32], sizes = [2, 32], strides = [1, 1]} : vector<2x96xf32> to vector<2x32xf32>
    %135 = arith.mulf %134, %119 : vector<2x32xf32>
    %136 = vector.extract_strided_slice %131 {offsets = [0, 0], sizes = [2, 32], strides = [1, 1]} : vector<2x96xf32> to vector<2x32xf32>
    %137 = arith.mulf %136, %133 : vector<2x32xf32>
    %138 = arith.addf %135, %137 : vector<2x32xf32>
    %139 = vector.extract_strided_slice %131 {offsets = [0, 64], sizes = [2, 32], strides = [1, 1]} : vector<2x96xf32> to vector<2x32xf32>
    %140 = math.tanh %138 : vector<2x32xf32>
    %141 = arith.mulf %139, %140 : vector<2x32xf32>
    %142 = vector.extract_strided_slice %5 {offsets = [0, 896], sizes = [2, 128], strides = [1, 1]} : vector<2x1024xf32> to vector<2x128xf32>
    %cst_23 = arith.constant dense<0.000000e+00> : vector<2x128xf32>
    %143 = tpu.matmul %141, %6, %cst_23 {dimension_numbers = #tpu.dot_dimension_numbers<[1], [0], [0], [1], [0, 0, 1, 1], [], []>} : vector<2x32xf32>, vector<32x128xf32>, vector<2x128xf32> -> vector<2x128xf32>
    %144 = arith.addf %142, %143 : vector<2x128xf32>
    %145 = vector.extract_strided_slice %144 {offsets = [0, 0], sizes = [2, 96], strides = [1, 1]} : vector<2x128xf32> to vector<2x96xf32>
    %146 = arith.negf %145 : vector<2x96xf32>
    %147 = math.exp %146 : vector<2x96xf32>
    %cst_24 = arith.constant 1.000000e+00 : f32
    %148 = vector.broadcast %cst_24 : f32 to vector<2x96xf32>
    %149 = arith.addf %148, %147 : vector<2x96xf32>
    %150 = arith.divf %148, %149 : vector<2x96xf32>
    %151 = vector.extract_strided_slice %144 {offsets = [0, 96], sizes = [2, 32], strides = [1, 1]} : vector<2x128xf32> to vector<2x32xf32>
    %152 = math.tanh %151 : vector<2x32xf32>
    %153 = vector.extract_strided_slice %150 {offsets = [0, 32], sizes = [2, 32], strides = [1, 1]} : vector<2x96xf32> to vector<2x32xf32>
    %154 = arith.mulf %153, %138 : vector<2x32xf32>
    %155 = vector.extract_strided_slice %150 {offsets = [0, 0], sizes = [2, 32], strides = [1, 1]} : vector<2x96xf32> to vector<2x32xf32>
    %156 = arith.mulf %155, %152 : vector<2x32xf32>
    %157 = arith.addf %154, %156 : vector<2x32xf32>
    %158 = vector.extract_strided_slice %150 {offsets = [0, 64], sizes = [2, 32], strides = [1, 1]} : vector<2x96xf32> to vector<2x32xf32>
    %159 = math.tanh %157 : vector<2x32xf32>
    %160 = arith.mulf %158, %159 : vector<2x32xf32>
    %c0_25 = arith.constant 0 : index
    %c0_26 = arith.constant 0 : index
    %161 = vector.load %arg5[%c0_25, %c0_26] : memref<32x16xf32, #tpu.memory_space<vmem>>, vector<32x16xf32>
    %cst_27 = arith.constant dense<0.000000e+00> : vector<2x16xf32>
    %162 = tpu.matmul %160, %161, %cst_27 {dimension_numbers = #tpu.dot_dimension_numbers<[1], [0], [0], [1], [0, 0, 1, 1], [], []>} : vector<2x32xf32>, vector<32x16xf32>, vector<2x16xf32> -> vector<2x16xf32>
    %c0_28 = arith.constant 0 : index
    %c0_29 = arith.constant 0 : index
    %163 = vector.load %arg6[%c0_28, %c0_29] : memref<1x16xf32, #tpu.memory_space<vmem>>, vector<1x16xf32>
    %164 = vector.broadcast %163 : vector<1x16xf32> to vector<2x16xf32>
    %165 = arith.addf %162, %164 : vector<2x16xf32>
    %c0_30 = arith.constant 0 : index
    %c0_31 = arith.constant 0 : index
    %166 = vector.load %arg7[%c0_30, %c0_31] : memref<32x16xf32, #tpu.memory_space<vmem>>, vector<32x16xf32>
    %cst_32 = arith.constant dense<0.000000e+00> : vector<2x16xf32>
    %167 = tpu.matmul %160, %166, %cst_32 {dimension_numbers = #tpu.dot_dimension_numbers<[1], [0], [0], [1], [0, 0, 1, 1], [], []>} : vector<2x32xf32>, vector<32x16xf32>, vector<2x16xf32> -> vector<2x16xf32>
    %c0_33 = arith.constant 0 : index
    %c0_34 = arith.constant 0 : index
    %168 = vector.load %arg8[%c0_33, %c0_34] : memref<1x16xf32, #tpu.memory_space<vmem>>, vector<1x16xf32>
    %169 = vector.broadcast %168 : vector<1x16xf32> to vector<2x16xf32>
    %170 = arith.addf %167, %169 : vector<2x16xf32>
    %c0_35 = arith.constant 0 : index
    %c0_36 = arith.constant 0 : index
    %171 = vector.load %arg1[%c0_35, %c0_36] : memref<2x16xf32, #tpu.memory_space<vmem>>, vector<2x16xf32>
    %172 = arith.mulf %170, %171 : vector<2x16xf32>
    %173 = arith.addf %165, %172 : vector<2x16xf32>
    %174 = arith.mulf %170, %170 : vector<2x16xf32>
    %175 = arith.mulf %165, %165 : vector<2x16xf32>
    %176 = arith.addf %174, %175 : vector<2x16xf32>
    %177 = arith.mulf %170, %170 : vector<2x16xf32>
    %178 = math.log %177 : vector<2x16xf32>
    %179 = arith.subf %176, %178 : vector<2x16xf32>
    %cst_37 = arith.constant 1.000000e+00 : f32
    %180 = vector.broadcast %cst_37 : f32 to vector<2x16xf32>
    %181 = arith.subf %179, %180 : vector<2x16xf32>
    %cst_38 = arith.constant dense<0.000000e+00> : vector<2xf32>
    %182 = vector.multi_reduction <add>, %181, %cst_38 [1] : vector<2x16xf32> to vector<2xf32>
    %183 = vector.shape_cast %182 : vector<2xf32> to vector<2x1xf32>
    %cst_39 = arith.constant dense<0.000000e+00> : vector<1xf32>
    %184 = vector.multi_reduction <add>, %183, %cst_39 [0] : vector<2x1xf32> to vector<1xf32>
    %185 = vector.shape_cast %184 : vector<1xf32> to vector<1x1xf32>
    %cst_40 = arith.constant 5.000000e-01 : f32
    %186 = vector.broadcast %cst_40 : f32 to vector<1x1xf32>
    %187 = arith.mulf %186, %185 : vector<1x1xf32>
    %c0_41 = arith.constant 0 : index
    %c0_42 = arith.constant 0 : index
    %188 = vector.load %arg15[%c0_41, %c0_42] : memref<1x1xf32, #tpu.memory_space<vmem>>, vector<1x1xf32>
    tpu.vector_store %arg15[%c0_41, %c0_42], %187 {strides = array<i32>} : memref<1x1xf32, #tpu.memory_space<vmem>>, vector<1x1xf32>,
    %c0_43 = arith.constant 0 : index
    %c0_44 = arith.constant 0 : index
    %189 = vector.load %arg9[%c0_43, %c0_44] : memref<16x256xf32, #tpu.memory_space<vmem>>, vector<16x256xf32>
    %cst_45 = arith.constant dense<0.000000e+00> : vector<2x256xf32>
    %190 = tpu.matmul %173, %189, %cst_45 {dimension_numbers = #tpu.dot_dimension_numbers<[1], [0], [0], [1], [0, 0, 1, 1], [], []>} : vector<2x16xf32>, vector<16x256xf32>, vector<2x256xf32> -> vector<2x256xf32>
    %c0_46 = arith.constant 0 : index
    %c0_47 = arith.constant 0 : index
    %191 = vector.load %arg10[%c0_46, %c0_47] : memref<1x256xf32, #tpu.memory_space<vmem>>, vector<1x256xf32>
    %192 = vector.broadcast %191 : vector<1x256xf32> to vector<2x256xf32>
    %193 = arith.addf %190, %192 : vector<2x256xf32>
    %cst_48 = arith.constant 0.000000e+00 : f32
    %194 = vector.broadcast %cst_48 : f32 to vector<2x256xf32>
    %195 = arith.maximumf %193, %194 : vector<2x256xf32>
    %c0_49 = arith.constant 0 : index
    %c0_50 = arith.constant 0 : index
    %196 = vector.load %arg11[%c0_49, %c0_50] : memref<256x128xf32, #tpu.memory_space<vmem>>, vector<256x128xf32>
    %cst_51 = arith.constant dense<0.000000e+00> : vector<2x128xf32>
    %197 = tpu.matmul %195, %196, %cst_51 {dimension_numbers = #tpu.dot_dimension_numbers<[1], [0], [0], [1], [0, 0, 1, 1], [], []>} : vector<2x256xf32>, vector<256x128xf32>, vector<2x128xf32> -> vector<2x128xf32>
    %c0_52 = arith.constant 0 : index
    %c0_53 = arith.constant 0 : index
    %198 = vector.load %arg12[%c0_52, %c0_53] : memref<1x128xf32, #tpu.memory_space<vmem>>, vector<1x128xf32>
    %199 = vector.broadcast %198 : vector<1x128xf32> to vector<2x128xf32>
    %200 = arith.addf %197, %199 : vector<2x128xf32>
    %c0_54 = arith.constant 0 : index
    %c0_55 = arith.constant 0 : index
    %201 = vector.load %arg13[%c0_54, %c0_55] : memref<4x16xf32, #tpu.memory_space<vmem>>, vector<1x16xf32>
    %c1 = arith.constant 1 : index
    %c0_56 = arith.constant 0 : index
    %202 = vector.load %arg13[%c1, %c0_56] : memref<4x16xf32, #tpu.memory_space<vmem>>, vector<1x16xf32>
    %c2 = arith.constant 2 : index
    %c0_57 = arith.constant 0 : index
    %203 = vector.load %arg13[%c2, %c0_57] : memref<4x16xf32, #tpu.memory_space<vmem>>, vector<1x16xf32>
    %c3 = arith.constant 3 : index
    %c0_58 = arith.constant 0 : index
    %204 = vector.load %arg13[%c3, %c0_58] : memref<4x16xf32, #tpu.memory_space<vmem>>, vector<1x16xf32>
    %cst_59 = arith.constant 0.000000e+00 : f32
    %205 = vector.broadcast %cst_59 : f32 to vector<2x4xf32>
    %cst_60 = arith.constant 0.000000e+00 : f32
    %206 = vector.broadcast %cst_60 : f32 to vector<2x4xf32>
    %207 = vector.extract_strided_slice %200 {offsets = [0, 0], sizes = [2, 16], strides = [1, 1]} : vector<2x128xf32> to vector<2x16xf32>
    %208 = vector.extract_strided_slice %205 {offsets = [0, 0], sizes = [2, 1], strides = [1, 1]} : vector<2x4xf32> to vector<2x1xf32>
    %209 = vector.broadcast %208 : vector<2x1xf32> to vector<2x16xf32>
    %210 = vector.broadcast %201 : vector<1x16xf32> to vector<2x16xf32>
    %211 = arith.mulf %209, %210 : vector<2x16xf32>
    %212 = arith.addf %207, %211 : vector<2x16xf32>
    %213 = vector.extract_strided_slice %205 {offsets = [0, 1], sizes = [2, 1], strides = [1, 1]} : vector<2x4xf32> to vector<2x1xf32>
    %214 = vector.broadcast %213 : vector<2x1xf32> to vector<2x16xf32>
    %215 = vector.broadcast %202 : vector<1x16xf32> to vector<2x16xf32>
    %216 = arith.mulf %214, %215 : vector<2x16xf32>
    %217 = arith.addf %212, %216 : vector<2x16xf32>
    %218 = vector.extract_strided_slice %205 {offsets = [0, 2], sizes = [2, 1], strides = [1, 1]} : vector<2x4xf32> to vector<2x1xf32>
    %219 = vector.broadcast %218 : vector<2x1xf32> to vector<2x16xf32>
    %220 = vector.broadcast %203 : vector<1x16xf32> to vector<2x16xf32>
    %221 = arith.mulf %219, %220 : vector<2x16xf32>
    %222 = arith.addf %217, %221 : vector<2x16xf32>
    %223 = vector.extract_strided_slice %205 {offsets = [0, 3], sizes = [2, 1], strides = [1, 1]} : vector<2x4xf32> to vector<2x1xf32>
    %224 = vector.broadcast %223 : vector<2x1xf32> to vector<2x16xf32>
    %225 = vector.broadcast %204 : vector<1x16xf32> to vector<2x16xf32>
    %226 = arith.mulf %224, %225 : vector<2x16xf32>
    %227 = arith.addf %222, %226 : vector<2x16xf32>
    %228 = vector.extract_strided_slice %227 {offsets = [0, 0], sizes = [2, 12], strides = [1, 1]} : vector<2x16xf32> to vector<2x12xf32>
    %229 = arith.negf %228 : vector<2x12xf32>
    %230 = math.exp %229 : vector<2x12xf32>
    %cst_61 = arith.constant 1.000000e+00 : f32
    %231 = vector.broadcast %cst_61 : f32 to vector<2x12xf32>
    %232 = arith.addf %231, %230 : vector<2x12xf32>
    %233 = arith.divf %231, %232 : vector<2x12xf32>
    %234 = vector.extract_strided_slice %227 {offsets = [0, 12], sizes = [2, 4], strides = [1, 1]} : vector<2x16xf32> to vector<2x4xf32>
    %235 = math.tanh %234 : vector<2x4xf32>
    %236 = vector.extract_strided_slice %233 {offsets = [0, 4], sizes = [2, 4], strides = [1, 1]} : vector<2x12xf32> to vector<2x4xf32>
    %237 = arith.mulf %236, %206 : vector<2x4xf32>
    %238 = vector.extract_strided_slice %233 {offsets = [0, 0], sizes = [2, 4], strides = [1, 1]} : vector<2x12xf32> to vector<2x4xf32>
    %239 = arith.mulf %238, %235 : vector<2x4xf32>
    %240 = arith.addf %237, %239 : vector<2x4xf32>
    %241 = vector.extract_strided_slice %233 {offsets = [0, 8], sizes = [2, 4], strides = [1, 1]} : vector<2x12xf32> to vector<2x4xf32>
    %242 = math.tanh %240 : vector<2x4xf32>
    %243 = arith.mulf %241, %242 : vector<2x4xf32>
    %244 = vector.extract_strided_slice %200 {offsets = [0, 16], sizes = [2, 16], strides = [1, 1]} : vector<2x128xf32> to vector<2x16xf32>
    %245 = vector.extract_strided_slice %243 {offsets = [0, 0], sizes = [2, 1], strides = [1, 1]} : vector<2x4xf32> to vector<2x1xf32>
    %246 = vector.broadcast %245 : vector<2x1xf32> to vector<2x16xf32>
    %247 = vector.broadcast %201 : vector<1x16xf32> to vector<2x16xf32>
    %248 = arith.mulf %246, %247 : vector<2x16xf32>
    %249 = arith.addf %244, %248 : vector<2x16xf32>
    %250 = vector.extract_strided_slice %243 {offsets = [0, 1], sizes = [2, 1], strides = [1, 1]} : vector<2x4xf32> to vector<2x1xf32>
    %251 = vector.broadcast %250 : vector<2x1xf32> to vector<2x16xf32>
    %252 = vector.broadcast %202 : vector<1x16xf32> to vector<2x16xf32>
    %253 = arith.mulf %251, %252 : vector<2x16xf32>
    %254 = arith.addf %249, %253 : vector<2x16xf32>
    %255 = vector.extract_strided_slice %243 {offsets = [0, 2], sizes = [2, 1], strides = [1, 1]} : vector<2x4xf32> to vector<2x1xf32>
    %256 = vector.broadcast %255 : vector<2x1xf32> to vector<2x16xf32>
    %257 = vector.broadcast %203 : vector<1x16xf32> to vector<2x16xf32>
    %258 = arith.mulf %256, %257 : vector<2x16xf32>
    %259 = arith.addf %254, %258 : vector<2x16xf32>
    %260 = vector.extract_strided_slice %243 {offsets = [0, 3], sizes = [2, 1], strides = [1, 1]} : vector<2x4xf32> to vector<2x1xf32>
    %261 = vector.broadcast %260 : vector<2x1xf32> to vector<2x16xf32>
    %262 = vector.broadcast %204 : vector<1x16xf32> to vector<2x16xf32>
    %263 = arith.mulf %261, %262 : vector<2x16xf32>
    %264 = arith.addf %259, %263 : vector<2x16xf32>
    %265 = vector.extract_strided_slice %264 {offsets = [0, 0], sizes = [2, 12], strides = [1, 1]} : vector<2x16xf32> to vector<2x12xf32>
    %266 = arith.negf %265 : vector<2x12xf32>
    %267 = math.exp %266 : vector<2x12xf32>
    %cst_62 = arith.constant 1.000000e+00 : f32
    %268 = vector.broadcast %cst_62 : f32 to vector<2x12xf32>
    %269 = arith.addf %268, %267 : vector<2x12xf32>
    %270 = arith.divf %268, %269 : vector<2x12xf32>
    %271 = vector.extract_strided_slice %264 {offsets = [0, 12], sizes = [2, 4], strides = [1, 1]} : vector<2x16xf32> to vector<2x4xf32>
    %272 = math.tanh %271 : vector<2x4xf32>
    %273 = vector.extract_strided_slice %270 {offsets = [0, 4], sizes = [2, 4], strides = [1, 1]} : vector<2x12xf32> to vector<2x4xf32>
    %274 = arith.mulf %273, %240 : vector<2x4xf32>
    %275 = vector.extract_strided_slice %270 {offsets = [0, 0], sizes = [2, 4], strides = [1, 1]} : vector<2x12xf32> to vector<2x4xf32>
    %276 = arith.mulf %275, %272 : vector<2x4xf32>
    %277 = arith.addf %274, %276 : vector<2x4xf32>
    %278 = vector.extract_strided_slice %270 {offsets = [0, 8], sizes = [2, 4], strides = [1, 1]} : vector<2x12xf32> to vector<2x4xf32>
    %279 = math.tanh %277 : vector<2x4xf32>
    %280 = arith.mulf %278, %279 : vector<2x4xf32>
    %281 = vector.extract_strided_slice %200 {offsets = [0, 32], sizes = [2, 16], strides = [1, 1]} : vector<2x128xf32> to vector<2x16xf32>
    %282 = vector.extract_strided_slice %280 {offsets = [0, 0], sizes = [2, 1], strides = [1, 1]} : vector<2x4xf32> to vector<2x1xf32>
    %283 = vector.broadcast %282 : vector<2x1xf32> to vector<2x16xf32>
    %284 = vector.broadcast %201 : vector<1x16xf32> to vector<2x16xf32>
    %285 = arith.mulf %283, %284 : vector<2x16xf32>
    %286 = arith.addf %281, %285 : vector<2x16xf32>
    %287 = vector.extract_strided_slice %280 {offsets = [0, 1], sizes = [2, 1], strides = [1, 1]} : vector<2x4xf32> to vector<2x1xf32>
    %288 = vector.broadcast %287 : vector<2x1xf32> to vector<2x16xf32>
    %289 = vector.broadcast %202 : vector<1x16xf32> to vector<2x16xf32>
    %290 = arith.mulf %288, %289 : vector<2x16xf32>
    %291 = arith.addf %286, %290 : vector<2x16xf32>
    %292 = vector.extract_strided_slice %280 {offsets = [0, 2], sizes = [2, 1], strides = [1, 1]} : vector<2x4xf32> to vector<2x1xf32>
    %293 = vector.broadcast %292 : vector<2x1xf32> to vector<2x16xf32>
    %294 = vector.broadcast %203 : vector<1x16xf32> to vector<2x16xf32>
    %295 = arith.mulf %293, %294 : vector<2x16xf32>
    %296 = arith.addf %291, %295 : vector<2x16xf32>
    %297 = vector.extract_strided_slice %280 {offsets = [0, 3], sizes = [2, 1], strides = [1, 1]} : vector<2x4xf32> to vector<2x1xf32>
    %298 = vector.broadcast %297 : vector<2x1xf32> to vector<2x16xf32>
    %299 = vector.broadcast %204 : vector<1x16xf32> to vector<2x16xf32>
    %300 = arith.mulf %298, %299 : vector<2x16xf32>
    %301 = arith.addf %296, %300 : vector<2x16xf32>
    %302 = vector.extract_strided_slice %301 {offsets = [0, 0], sizes = [2, 12], strides = [1, 1]} : vector<2x16xf32> to vector<2x12xf32>
    %303 = arith.negf %302 : vector<2x12xf32>
    %304 = math.exp %303 : vector<2x12xf32>
    %cst_63 = arith.constant 1.000000e+00 : f32
    %305 = vector.broadcast %cst_63 : f32 to vector<2x12xf32>
    %306 = arith.addf %305, %304 : vector<2x12xf32>
    %307 = arith.divf %305, %306 : vector<2x12xf32>
    %308 = vector.extract_strided_slice %301 {offsets = [0, 12], sizes = [2, 4], strides = [1, 1]} : vector<2x16xf32> to vector<2x4xf32>
    %309 = math.tanh %308 : vector<2x4xf32>
    %310 = vector.extract_strided_slice %307 {offsets = [0, 4], sizes = [2, 4], strides = [1, 1]} : vector<2x12xf32> to vector<2x4xf32>
    %311 = arith.mulf %310, %277 : vector<2x4xf32>
    %312 = vector.extract_strided_slice %307 {offsets = [0, 0], sizes = [2, 4], strides = [1, 1]} : vector<2x12xf32> to vector<2x4xf32>
    %313 = arith.mulf %312, %309 : vector<2x4xf32>
    %314 = arith.addf %311, %313 : vector<2x4xf32>
    %315 = vector.extract_strided_slice %307 {offsets = [0, 8], sizes = [2, 4], strides = [1, 1]} : vector<2x12xf32> to vector<2x4xf32>
    %316 = math.tanh %314 : vector<2x4xf32>
    %317 = arith.mulf %315, %316 : vector<2x4xf32>
    %318 = vector.extract_strided_slice %200 {offsets = [0, 48], sizes = [2, 16], strides = [1, 1]} : vector<2x128xf32> to vector<2x16xf32>
    %319 = vector.extract_strided_slice %317 {offsets = [0, 0], sizes = [2, 1], strides = [1, 1]} : vector<2x4xf32> to vector<2x1xf32>
    %320 = vector.broadcast %319 : vector<2x1xf32> to vector<2x16xf32>
    %321 = vector.broadcast %201 : vector<1x16xf32> to vector<2x16xf32>
    %322 = arith.mulf %320, %321 : vector<2x16xf32>
    %323 = arith.addf %318, %322 : vector<2x16xf32>
    %324 = vector.extract_strided_slice %317 {offsets = [0, 1], sizes = [2, 1], strides = [1, 1]} : vector<2x4xf32> to vector<2x1xf32>
    %325 = vector.broadcast %324 : vector<2x1xf32> to vector<2x16xf32>
    %326 = vector.broadcast %202 : vector<1x16xf32> to vector<2x16xf32>
    %327 = arith.mulf %325, %326 : vector<2x16xf32>
    %328 = arith.addf %323, %327 : vector<2x16xf32>
    %329 = vector.extract_strided_slice %317 {offsets = [0, 2], sizes = [2, 1], strides = [1, 1]} : vector<2x4xf32> to vector<2x1xf32>
    %330 = vector.broadcast %329 : vector<2x1xf32> to vector<2x16xf32>
    %331 = vector.broadcast %203 : vector<1x16xf32> to vector<2x16xf32>
    %332 = arith.mulf %330, %331 : vector<2x16xf32>
    %333 = arith.addf %328, %332 : vector<2x16xf32>
    %334 = vector.extract_strided_slice %317 {offsets = [0, 3], sizes = [2, 1], strides = [1, 1]} : vector<2x4xf32> to vector<2x1xf32>
    %335 = vector.broadcast %334 : vector<2x1xf32> to vector<2x16xf32>
    %336 = vector.broadcast %204 : vector<1x16xf32> to vector<2x16xf32>
    %337 = arith.mulf %335, %336 : vector<2x16xf32>
    %338 = arith.addf %333, %337 : vector<2x16xf32>
    %339 = vector.extract_strided_slice %338 {offsets = [0, 0], sizes = [2, 12], strides = [1, 1]} : vector<2x16xf32> to vector<2x12xf32>
    %340 = arith.negf %339 : vector<2x12xf32>
    %341 = math.exp %340 : vector<2x12xf32>
    %cst_64 = arith.constant 1.000000e+00 : f32
    %342 = vector.broadcast %cst_64 : f32 to vector<2x12xf32>
    %343 = arith.addf %342, %341 : vector<2x12xf32>
    %344 = arith.divf %342, %343 : vector<2x12xf32>
    %345 = vector.extract_strided_slice %338 {offsets = [0, 12], sizes = [2, 4], strides = [1, 1]} : vector<2x16xf32> to vector<2x4xf32>
    %346 = math.tanh %345 : vector<2x4xf32>
    %347 = vector.extract_strided_slice %344 {offsets = [0, 4], sizes = [2, 4], strides = [1, 1]} : vector<2x12xf32> to vector<2x4xf32>
    %348 = arith.mulf %347, %314 : vector<2x4xf32>
    %349 = vector.extract_strided_slice %344 {offsets = [0, 0], sizes = [2, 4], strides = [1, 1]} : vector<2x12xf32> to vector<2x4xf32>
    %350 = arith.mulf %349, %346 : vector<2x4xf32>
    %351 = arith.addf %348, %350 : vector<2x4xf32>
    %352 = vector.extract_strided_slice %344 {offsets = [0, 8], sizes = [2, 4], strides = [1, 1]} : vector<2x12xf32> to vector<2x4xf32>
    %353 = math.tanh %351 : vector<2x4xf32>
    %354 = arith.mulf %352, %353 : vector<2x4xf32>
    %355 = vector.extract_strided_slice %200 {offsets = [0, 64], sizes = [2, 16], strides = [1, 1]} : vector<2x128xf32> to vector<2x16xf32>
    %356 = vector.extract_strided_slice %354 {offsets = [0, 0], sizes = [2, 1], strides = [1, 1]} : vector<2x4xf32> to vector<2x1xf32>
    %357 = vector.broadcast %356 : vector<2x1xf32> to vector<2x16xf32>
    %358 = vector.broadcast %201 : vector<1x16xf32> to vector<2x16xf32>
    %359 = arith.mulf %357, %358 : vector<2x16xf32>
    %360 = arith.addf %355, %359 : vector<2x16xf32>
    %361 = vector.extract_strided_slice %354 {offsets = [0, 1], sizes = [2, 1], strides = [1, 1]} : vector<2x4xf32> to vector<2x1xf32>
    %362 = vector.broadcast %361 : vector<2x1xf32> to vector<2x16xf32>
    %363 = vector.broadcast %202 : vector<1x16xf32> to vector<2x16xf32>
    %364 = arith.mulf %362, %363 : vector<2x16xf32>
    %365 = arith.addf %360, %364 : vector<2x16xf32>
    %366 = vector.extract_strided_slice %354 {offsets = [0, 2], sizes = [2, 1], strides = [1, 1]} : vector<2x4xf32> to vector<2x1xf32>
    %367 = vector.broadcast %366 : vector<2x1xf32> to vector<2x16xf32>
    %368 = vector.broadcast %203 : vector<1x16xf32> to vector<2x16xf32>
    %369 = arith.mulf %367, %368 : vector<2x16xf32>
    %370 = arith.addf %365, %369 : vector<2x16xf32>
    %371 = vector.extract_strided_slice %354 {offsets = [0, 3], sizes = [2, 1], strides = [1, 1]} : vector<2x4xf32> to vector<2x1xf32>
    %372 = vector.broadcast %371 : vector<2x1xf32> to vector<2x16xf32>
    %373 = vector.broadcast %204 : vector<1x16xf32> to vector<2x16xf32>
    %374 = arith.mulf %372, %373 : vector<2x16xf32>
    %375 = arith.addf %370, %374 : vector<2x16xf32>
    %376 = vector.extract_strided_slice %375 {offsets = [0, 0], sizes = [2, 12], strides = [1, 1]} : vector<2x16xf32> to vector<2x12xf32>
    %377 = arith.negf %376 : vector<2x12xf32>
    %378 = math.exp %377 : vector<2x12xf32>
    %cst_65 = arith.constant 1.000000e+00 : f32
    %379 = vector.broadcast %cst_65 : f32 to vector<2x12xf32>
    %380 = arith.addf %379, %378 : vector<2x12xf32>
    %381 = arith.divf %379, %380 : vector<2x12xf32>
    %382 = vector.extract_strided_slice %375 {offsets = [0, 12], sizes = [2, 4], strides = [1, 1]} : vector<2x16xf32> to vector<2x4xf32>
    %383 = math.tanh %382 : vector<2x4xf32>
    %384 = vector.extract_strided_slice %381 {offsets = [0, 4], sizes = [2, 4], strides = [1, 1]} : vector<2x12xf32> to vector<2x4xf32>
    %385 = arith.mulf %384, %351 : vector<2x4xf32>
    %386 = vector.extract_strided_slice %381 {offsets = [0, 0], sizes = [2, 4], strides = [1, 1]} : vector<2x12xf32> to vector<2x4xf32>
    %387 = arith.mulf %386, %383 : vector<2x4xf32>
    %388 = arith.addf %385, %387 : vector<2x4xf32>
    %389 = vector.extract_strided_slice %381 {offsets = [0, 8], sizes = [2, 4], strides = [1, 1]} : vector<2x12xf32> to vector<2x4xf32>
    %390 = math.tanh %388 : vector<2x4xf32>
    %391 = arith.mulf %389, %390 : vector<2x4xf32>
    %392 = vector.extract_strided_slice %200 {offsets = [0, 80], sizes = [2, 16], strides = [1, 1]} : vector<2x128xf32> to vector<2x16xf32>
    %393 = vector.extract_strided_slice %391 {offsets = [0, 0], sizes = [2, 1], strides = [1, 1]} : vector<2x4xf32> to vector<2x1xf32>
    %394 = vector.broadcast %393 : vector<2x1xf32> to vector<2x16xf32>
    %395 = vector.broadcast %201 : vector<1x16xf32> to vector<2x16xf32>
    %396 = arith.mulf %394, %395 : vector<2x16xf32>
    %397 = arith.addf %392, %396 : vector<2x16xf32>
    %398 = vector.extract_strided_slice %391 {offsets = [0, 1], sizes = [2, 1], strides = [1, 1]} : vector<2x4xf32> to vector<2x1xf32>
    %399 = vector.broadcast %398 : vector<2x1xf32> to vector<2x16xf32>
    %400 = vector.broadcast %202 : vector<1x16xf32> to vector<2x16xf32>
    %401 = arith.mulf %399, %400 : vector<2x16xf32>
    %402 = arith.addf %397, %401 : vector<2x16xf32>
    %403 = vector.extract_strided_slice %391 {offsets = [0, 2], sizes = [2, 1], strides = [1, 1]} : vector<2x4xf32> to vector<2x1xf32>
    %404 = vector.broadcast %403 : vector<2x1xf32> to vector<2x16xf32>
    %405 = vector.broadcast %203 : vector<1x16xf32> to vector<2x16xf32>
    %406 = arith.mulf %404, %405 : vector<2x16xf32>
    %407 = arith.addf %402, %406 : vector<2x16xf32>
    %408 = vector.extract_strided_slice %391 {offsets = [0, 3], sizes = [2, 1], strides = [1, 1]} : vector<2x4xf32> to vector<2x1xf32>
    %409 = vector.broadcast %408 : vector<2x1xf32> to vector<2x16xf32>
    %410 = vector.broadcast %204 : vector<1x16xf32> to vector<2x16xf32>
    %411 = arith.mulf %409, %410 : vector<2x16xf32>
    %412 = arith.addf %407, %411 : vector<2x16xf32>
    %413 = vector.extract_strided_slice %412 {offsets = [0, 0], sizes = [2, 12], strides = [1, 1]} : vector<2x16xf32> to vector<2x12xf32>
    %414 = arith.negf %413 : vector<2x12xf32>
    %415 = math.exp %414 : vector<2x12xf32>
    %cst_66 = arith.constant 1.000000e+00 : f32
    %416 = vector.broadcast %cst_66 : f32 to vector<2x12xf32>
    %417 = arith.addf %416, %415 : vector<2x12xf32>
    %418 = arith.divf %416, %417 : vector<2x12xf32>
    %419 = vector.extract_strided_slice %412 {offsets = [0, 12], sizes = [2, 4], strides = [1, 1]} : vector<2x16xf32> to vector<2x4xf32>
    %420 = math.tanh %419 : vector<2x4xf32>
    %421 = vector.extract_strided_slice %418 {offsets = [0, 4], sizes = [2, 4], strides = [1, 1]} : vector<2x12xf32> to vector<2x4xf32>
    %422 = arith.mulf %421, %388 : vector<2x4xf32>
    %423 = vector.extract_strided_slice %418 {offsets = [0, 0], sizes = [2, 4], strides = [1, 1]} : vector<2x12xf32> to vector<2x4xf32>
    %424 = arith.mulf %423, %420 : vector<2x4xf32>
    %425 = arith.addf %422, %424 : vector<2x4xf32>
    %426 = vector.extract_strided_slice %418 {offsets = [0, 8], sizes = [2, 4], strides = [1, 1]} : vector<2x12xf32> to vector<2x4xf32>
    %427 = math.tanh %425 : vector<2x4xf32>
    %428 = arith.mulf %426, %427 : vector<2x4xf32>
    %429 = vector.extract_strided_slice %200 {offsets = [0, 96], sizes = [2, 16], strides = [1, 1]} : vector<2x128xf32> to vector<2x16xf32>
    %430 = vector.extract_strided_slice %428 {offsets = [0, 0], sizes = [2, 1], strides = [1, 1]} : vector<2x4xf32> to vector<2x1xf32>
    %431 = vector.broadcast %430 : vector<2x1xf32> to vector<2x16xf32>
    %432 = vector.broadcast %201 : vector<1x16xf32> to vector<2x16xf32>
    %433 = arith.mulf %431, %432 : vector<2x16xf32>
    %434 = arith.addf %429, %433 : vector<2x16xf32>
    %435 = vector.extract_strided_slice %428 {offsets = [0, 1], sizes = [2, 1], strides = [1, 1]} : vector<2x4xf32> to vector<2x1xf32>
    %436 = vector.broadcast %435 : vector<2x1xf32> to vector<2x16xf32>
    %437 = vector.broadcast %202 : vector<1x16xf32> to vector<2x16xf32>
    %438 = arith.mulf %436, %437 : vector<2x16xf32>
    %439 = arith.addf %434, %438 : vector<2x16xf32>
    %440 = vector.extract_strided_slice %428 {offsets = [0, 2], sizes = [2, 1], strides = [1, 1]} : vector<2x4xf32> to vector<2x1xf32>
    %441 = vector.broadcast %440 : vector<2x1xf32> to vector<2x16xf32>
    %442 = vector.broadcast %203 : vector<1x16xf32> to vector<2x16xf32>
    %443 = arith.mulf %441, %442 : vector<2x16xf32>
    %444 = arith.addf %439, %443 : vector<2x16xf32>
    %445 = vector.extract_strided_slice %428 {offsets = [0, 3], sizes = [2, 1], strides = [1, 1]} : vector<2x4xf32> to vector<2x1xf32>
    %446 = vector.broadcast %445 : vector<2x1xf32> to vector<2x16xf32>
    %447 = vector.broadcast %204 : vector<1x16xf32> to vector<2x16xf32>
    %448 = arith.mulf %446, %447 : vector<2x16xf32>
    %449 = arith.addf %444, %448 : vector<2x16xf32>
    %450 = vector.extract_strided_slice %449 {offsets = [0, 0], sizes = [2, 12], strides = [1, 1]} : vector<2x16xf32> to vector<2x12xf32>
    %451 = arith.negf %450 : vector<2x12xf32>
    %452 = math.exp %451 : vector<2x12xf32>
    %cst_67 = arith.constant 1.000000e+00 : f32
    %453 = vector.broadcast %cst_67 : f32 to vector<2x12xf32>
    %454 = arith.addf %453, %452 : vector<2x12xf32>
    %455 = arith.divf %453, %454 : vector<2x12xf32>
    %456 = vector.extract_strided_slice %449 {offsets = [0, 12], sizes = [2, 4], strides = [1, 1]} : vector<2x16xf32> to vector<2x4xf32>
    %457 = math.tanh %456 : vector<2x4xf32>
    %458 = vector.extract_strided_slice %455 {offsets = [0, 4], sizes = [2, 4], strides = [1, 1]} : vector<2x12xf32> to vector<2x4xf32>
    %459 = arith.mulf %458, %425 : vector<2x4xf32>
    %460 = vector.extract_strided_slice %455 {offsets = [0, 0], sizes = [2, 4], strides = [1, 1]} : vector<2x12xf32> to vector<2x4xf32>
    %461 = arith.mulf %460, %457 : vector<2x4xf32>
    %462 = arith.addf %459, %461 : vector<2x4xf32>
    %463 = vector.extract_strided_slice %455 {offsets = [0, 8], sizes = [2, 4], strides = [1, 1]} : vector<2x12xf32> to vector<2x4xf32>
    %464 = math.tanh %462 : vector<2x4xf32>
    %465 = arith.mulf %463, %464 : vector<2x4xf32>
    %466 = vector.extract_strided_slice %200 {offsets = [0, 112], sizes = [2, 16], strides = [1, 1]} : vector<2x128xf32> to vector<2x16xf32>
    %467 = vector.extract_strided_slice %465 {offsets = [0, 0], sizes = [2, 1], strides = [1, 1]} : vector<2x4xf32> to vector<2x1xf32>
    %468 = vector.broadcast %467 : vector<2x1xf32> to vector<2x16xf32>
    %469 = vector.broadcast %201 : vector<1x16xf32> to vector<2x16xf32>
    %470 = arith.mulf %468, %469 : vector<2x16xf32>
    %471 = arith.addf %466, %470 : vector<2x16xf32>
    %472 = vector.extract_strided_slice %465 {offsets = [0, 1], sizes = [2, 1], strides = [1, 1]} : vector<2x4xf32> to vector<2x1xf32>
    %473 = vector.broadcast %472 : vector<2x1xf32> to vector<2x16xf32>
    %474 = vector.broadcast %202 : vector<1x16xf32> to vector<2x16xf32>
    %475 = arith.mulf %473, %474 : vector<2x16xf32>
    %476 = arith.addf %471, %475 : vector<2x16xf32>
    %477 = vector.extract_strided_slice %465 {offsets = [0, 2], sizes = [2, 1], strides = [1, 1]} : vector<2x4xf32> to vector<2x1xf32>
    %478 = vector.broadcast %477 : vector<2x1xf32> to vector<2x16xf32>
    %479 = vector.broadcast %203 : vector<1x16xf32> to vector<2x16xf32>
    %480 = arith.mulf %478, %479 : vector<2x16xf32>
    %481 = arith.addf %476, %480 : vector<2x16xf32>
    %482 = vector.extract_strided_slice %465 {offsets = [0, 3], sizes = [2, 1], strides = [1, 1]} : vector<2x4xf32> to vector<2x1xf32>
    %483 = vector.broadcast %482 : vector<2x1xf32> to vector<2x16xf32>
    %484 = vector.broadcast %204 : vector<1x16xf32> to vector<2x16xf32>
    %485 = arith.mulf %483, %484 : vector<2x16xf32>
    %486 = arith.addf %481, %485 : vector<2x16xf32>
    %487 = vector.extract_strided_slice %486 {offsets = [0, 0], sizes = [2, 12], strides = [1, 1]} : vector<2x16xf32> to vector<2x12xf32>
    %488 = arith.negf %487 : vector<2x12xf32>
    %489 = math.exp %488 : vector<2x12xf32>
    %cst_68 = arith.constant 1.000000e+00 : f32
    %490 = vector.broadcast %cst_68 : f32 to vector<2x12xf32>
    %491 = arith.addf %490, %489 : vector<2x12xf32>
    %492 = arith.divf %490, %491 : vector<2x12xf32>
    %493 = vector.extract_strided_slice %486 {offsets = [0, 12], sizes = [2, 4], strides = [1, 1]} : vector<2x16xf32> to vector<2x4xf32>
    %494 = math.tanh %493 : vector<2x4xf32>
    %495 = vector.extract_strided_slice %492 {offsets = [0, 4], sizes = [2, 4], strides = [1, 1]} : vector<2x12xf32> to vector<2x4xf32>
    %496 = arith.mulf %495, %462 : vector<2x4xf32>
    %497 = vector.extract_strided_slice %492 {offsets = [0, 0], sizes = [2, 4], strides = [1, 1]} : vector<2x12xf32> to vector<2x4xf32>
    %498 = arith.mulf %497, %494 : vector<2x4xf32>
    %499 = arith.addf %496, %498 : vector<2x4xf32>
    %500 = vector.extract_strided_slice %492 {offsets = [0, 8], sizes = [2, 4], strides = [1, 1]} : vector<2x12xf32> to vector<2x4xf32>
    %501 = math.tanh %499 : vector<2x4xf32>
    %502 = arith.mulf %500, %501 : vector<2x4xf32>
    %503 = tpu.concatenate %243, %280, %317, %354, %391, %428, %465, %502 in 1 : vector<2x4xf32>, vector<2x4xf32>, vector<2x4xf32>, vector<2x4xf32>, vector<2x4xf32>, vector<2x4xf32>, vector<2x4xf32>, vector<2x4xf32> -> vector<2x32xf32>
    %504 = arith.negf %503 : vector<2x32xf32>
    %505 = math.exp %504 : vector<2x32xf32>
    %cst_69 = arith.constant 1.000000e+00 : f32
    %506 = vector.broadcast %cst_69 : f32 to vector<2x32xf32>
    %507 = arith.addf %506, %505 : vector<2x32xf32>
    %508 = arith.divf %506, %507 : vector<2x32xf32>
    %c0_70 = arith.constant 0 : index
    %c0_71 = arith.constant 0 : index
    %509 = vector.load %arg14[%c0_70, %c0_71] : memref<2x32xf32, #tpu.memory_space<vmem>>, vector<2x32xf32>
    tpu.vector_store %arg14[%c0_70, %c0_71], %508 {strides = array<i32>} : memref<2x32xf32, #tpu.memory_space<vmem>>, vector<2x32xf32>,
    return
  }
}

</mosaic_0001>

<llo_original>
// kernel: recurrent_vae_forward.1
$region0: #{recurrent_vae_forward.1}
  #allocation0 [shape = 'u32[]', space=smem, size = 0x4, offset = 0x4, fixed_abs, tag = 'smem constant byte address 0x4 - core index']
  #allocation1 [shape = 'u32[144,128]{1,0:T(1,128)}', space=vmem, size = 0x12000, scoped, tag = 'internal scratch']
  %s0 = inlined_call_operand.vmem [shape: f32[2,32], index: 0, kind: input, shape index: {}]
  %s1 = inlined_call_operand.vmem [shape: f32[2,16], index: 1, kind: input, shape index: {}]
  %s2 = inlined_call_operand.hbm [shape: f32[32,1024], index: 2, kind: input, shape index: {}]
  %s3 = inlined_call_operand.vmem [shape: f32[1,1024], index: 3, kind: input, shape index: {}]
  %s4 = inlined_call_operand.vmem [shape: f32[32,128], index: 4, kind: input, shape index: {}]
  %s5 = inlined_call_operand.vmem [shape: f32[32,16], index: 5, kind: input, shape index: {}]
  %s6 = inlined_call_operand.vmem [shape: f32[1,16], index: 6, kind: input, shape index: {}]
  %s7 = inlined_call_operand.vmem [shape: f32[32,16], index: 7, kind: input, shape index: {}]
  %s8 = inlined_call_operand.vmem [shape: f32[1,16], index: 8, kind: input, shape index: {}]
  %s9 = inlined_call_operand.vmem [shape: f32[16,256], index: 9, kind: input, shape index: {}]
  %s10 = inlined_call_operand.vmem [shape: f32[1,256], index: 10, kind: input, shape index: {}]
  %s11 = inlined_call_operand.hbm [shape: f32[256,128], index: 11, kind: input, shape index: {}]
  %s12 = inlined_call_operand.vmem [shape: f32[1,128], index: 12, kind: input, shape index: {}]
  %s13 = inlined_call_operand.vmem [shape: f32[4,16], index: 13, kind: input, shape index: {}]
  %s14 = inlined_call_operand.vmem [shape: f32[2,32], index: 14, kind: output, shape index: {0}]
  %s15 = inlined_call_operand.hbm [shape: f32[1,1], index: 15, kind: output, shape index: {1}]
  %16 = xla_tuple %s14, %s15
  %s17 = sld [smem:[#allocation0]]
  $region82: #{recurrent_vae_forward.1} parent=0
    _
  %s19 = ssub.s32 1, %s17
  %s20 = scalar_select 0, %s19, %s17
  $region1: #{recurrent_vae_forward.1} parent=0
    #allocation2 [shape = 'u8[131072]{0}', space=vmem, size = 0x20000, scoped, tag = 'input window, operand 2, single buffered']
    #allocation3 [shape = 's32[1]{0}', space=sflag, size = 0x4, scoped, tag = 'scoped memory for recurrent_vae_forward.1']
    #allocation4 [shape = 's32[1]{0}', space=sflag, size = 0x4, scoped, tag = 'scoped memory for recurrent_vae_forward.1']
    #allocation5 [shape = 'u8[131072]{0}', space=vmem, size = 0x20000, scoped, tag = 'input window, operand 11, single buffered']
    #allocation6 [shape = 's32[1]{0}', space=sflag, size = 0x4, scoped, tag = 'scoped memory for recurrent_vae_forward.1']
    #allocation7 [shape = 'u8[512]{0}', space=vmem, size = 0x400, scoped, tag = 'output window, operand 1, single buffered']
    %21 = vsyncpa [#allocation3], 0
    %22 = vsyncpa [#allocation6], 0
    %23 = vsyncpa [#allocation4], 0
    // Predicated region
    $region2: #{recurrent_vae_forward.1} parent=1 // pred_check
      _
    $region3: #{recurrent_vae_forward.1} parent=1 // pred_check_branch
      %25 = sbr.rel (0) target = $region5
    $region4: #{recurrent_vae_forward.1} parent=1 // pred_region
      _
    $region5: #{recurrent_vae_forward.1} parent=1 // pred_fallthru
      _
    // Predicated region
    $region6: #{recurrent_vae_forward.1} parent=1 // pred_check
      _
    $region7: #{recurrent_vae_forward.1} parent=1 // pred_check_branch
      %27 = sbr.rel (0) target = $region9
    $region8: #{recurrent_vae_forward.1} parent=1 // pred_region
      _
    $region9: #{recurrent_vae_forward.1} parent=1 // pred_fallthru
      _
    // Predicated region
    $region10: #{recurrent_vae_forward.1} parent=1 // pred_check
      _
    $region11: #{recurrent_vae_forward.1} parent=1 // pred_check_branch
      %29 = sbr.rel (0) target = $region13
    $region12: #{recurrent_vae_forward.1} parent=1 // pred_region
      %s31 = ssub.s32 4096, 4096
      %32 = vsyncadd [#allocation3], %s31
      %s33 = sshll.u32 [#allocation2], 4
      %s34 = int_to_ptr.vmem [resolvable:$true] %s33
      %39 = dma.hbm_to_vmem [thread:$0]  %s2, 4096, %s34, [#allocation3], 1024, 1024, 64
    $region13: #{recurrent_vae_forward.1} parent=1 // pred_fallthru
      _
    // Predicated region
    $region14: #{recurrent_vae_forward.1} parent=1 // pred_check
      _
    $region15: #{recurrent_vae_forward.1} parent=1 // pred_check_branch
      %41 = sbr.rel (0) target = $region17
    $region16: #{recurrent_vae_forward.1} parent=1 // pred_region
      _
    $region17: #{recurrent_vae_forward.1} parent=1 // pred_fallthru
      _
    // Predicated region
    $region18: #{recurrent_vae_forward.1} parent=1 // pred_check
      _
    $region19: #{recurrent_vae_forward.1} parent=1 // pred_check_branch
      %43 = sbr.rel (0) target = $region21
    $region20: #{recurrent_vae_forward.1} parent=1 // pred_region
      _
    $region21: #{recurrent_vae_forward.1} parent=1 // pred_fallthru
      _
    // Predicated region
    $region22: #{recurrent_vae_forward.1} parent=1 // pred_check
      _
    $region23: #{recurrent_vae_forward.1} parent=1 // pred_check_branch
      %45 = sbr.rel (0) target = $region25
    $region24: #{recurrent_vae_forward.1} parent=1 // pred_region
      _
    $region25: #{recurrent_vae_forward.1} parent=1 // pred_fallthru
      _
    // Predicated region
    $region26: #{recurrent_vae_forward.1} parent=1 // pred_check
      _
    $region27: #{recurrent_vae_forward.1} parent=1 // pred_check_branch
      %47 = sbr.rel (0) target = $region29
    $region28: #{recurrent_vae_forward.1} parent=1 // pred_region
      _
    $region29: #{recurrent_vae_forward.1} parent=1 // pred_fallthru
      _
    // Predicated region
    $region30: #{recurrent_vae_forward.1} parent=1 // pred_check
      _
    $region31: #{recurrent_vae_forward.1} parent=1 // pred_check_branch
      %49 = sbr.rel (0) target = $region33
    $region32: #{recurrent_vae_forward.1} parent=1 // pred_region
      _
    $region33: #{recurrent_vae_forward.1} parent=1 // pred_fallthru
      _
    // Predicated region
    $region34: #{recurrent_vae_forward.1} parent=1 // pred_check
      _
    $region35: #{recurrent_vae_forward.1} parent=1 // pred_check_branch
      %51 = sbr.rel (0) target = $region37
    $region36: #{recurrent_vae_forward.1} parent=1 // pred_region
      _
    $region37: #{recurrent_vae_forward.1} parent=1 // pred_fallthru
      _
    // Predicated region
    $region38: #{recurrent_vae_forward.1} parent=1 // pred_check
      _
    $region39: #{recurrent_vae_forward.1} parent=1 // pred_check_branch
      %53 = sbr.rel (0) target = $region41
    $region40: #{recurrent_vae_forward.1} parent=1 // pred_region
      _
    $region41: #{recurrent_vae_forward.1} parent=1 // pred_fallthru
      _
    // Predicated region
    $region42: #{recurrent_vae_forward.1} parent=1 // pred_check
      _
    $region43: #{recurrent_vae_forward.1} parent=1 // pred_check_branch
      %55 = sbr.rel (0) target = $region45
    $region44: #{recurrent_vae_forward.1} parent=1 // pred_region
      _
    $region45: #{recurrent_vae_forward.1} parent=1 // pred_fallthru
      _
    // Predicated region
    $region46: #{recurrent_vae_forward.1} parent=1 // pred_check
      _
    $region47: #{recurrent_vae_forward.1} parent=1 // pred_check_branch
      %57 = sbr.rel (0) target = $region49
    $region48: #{recurrent_vae_forward.1} parent=1 // pred_region
      %s59 = ssub.s32 4096, 4096
      %60 = vsyncadd [#allocation6], %s59
      %s61 = sshll.u32 [#allocation5], 4
      %s62 = int_to_ptr.vmem [resolvable:$true] %s61
      %67 = dma.hbm_to_vmem [thread:$0]  %s11, 4096, %s62, [#allocation6], 128, 128, 8
    $region49: #{recurrent_vae_forward.1} parent=1 // pred_fallthru
      _
    // Predicated region
    $region50: #{recurrent_vae_forward.1} parent=1 // pred_check
      _
    $region51: #{recurrent_vae_forward.1} parent=1 // pred_check_branch
      %69 = sbr.rel (0) target = $region53
    $region52: #{recurrent_vae_forward.1} parent=1 // pred_region
      _
    $region53: #{recurrent_vae_forward.1} parent=1 // pred_fallthru
      _
    // Predicated region
    $region54: #{recurrent_vae_forward.1} parent=1 // pred_check
      _
    $region55: #{recurrent_vae_forward.1} parent=1 // pred_check_branch
      %71 = sbr.rel (0) target = $region57
    $region56: #{recurrent_vae_forward.1} parent=1 // pred_region
      _
    $region57: #{recurrent_vae_forward.1} parent=1 // pred_fallthru
      _
    // Predicated region
    $region58: #{recurrent_vae_forward.1} parent=1 // pred_check
      _
    $region59: #{recurrent_vae_forward.1} parent=1 // pred_check_branch
      %73 = sbr.rel (0) target = $region61
    $region60: #{recurrent_vae_forward.1} parent=1 // pred_region
      %74 = dma.done [#allocation3], 4096
    $region61: #{recurrent_vae_forward.1} parent=1 // pred_fallthru
      _
    // Predicated region
    $region62: #{recurrent_vae_forward.1} parent=1 // pred_check
      _
    $region63: #{recurrent_vae_forward.1} parent=1 // pred_check_branch
      %76 = sbr.rel (0) target = $region65
    $region64: #{recurrent_vae_forward.1} parent=1 // pred_region
      %77 = dma.done [#allocation6], 4096
    $region65: #{recurrent_vae_forward.1} parent=1 // pred_fallthru
      _
    %v78 = vld [vmem:[%s0] sm:$0x3]
    %v79 = vld [vmem:[#allocation2] sm:$0xff]
    %v80 = vld [vmem:[#allocation2 + $0x8] sm:$0xff]
    %v81 = vld [vmem:[#allocation2 + $0x10] sm:$0xff]
    %v82 = vld [vmem:[#allocation2 + $0x18] sm:$0xff]
    %v83 = vld [vmem:[#allocation2 + $0x20] sm:$0xff]
    %v84 = vld [vmem:[#allocation2 + $0x28] sm:$0xff]
    %v85 = vld [vmem:[#allocation2 + $0x30] sm:$0xff]
    %v86 = vld [vmem:[#allocation2 + $0x38] sm:$0xff]
    %v87 = vld [vmem:[#allocation2 + $0x40] sm:$0xff]
    %v88 = vld [vmem:[#allocation2 + $0x48] sm:$0xff]
    %v89 = vld [vmem:[#allocation2 + $0x50] sm:$0xff]
    %v90 = vld [vmem:[#allocation2 + $0x58] sm:$0xff]
    %v91 = vld [vmem:[#allocation2 + $0x60] sm:$0xff]
    %v92 = vld [vmem:[#allocation2 + $0x68] sm:$0xff]
    %v93 = vld [vmem:[#allocation2 + $0x70] sm:$0xff]
    %v94 = vld [vmem:[#allocation2 + $0x78] sm:$0xff]
    %v95 = vld [vmem:[#allocation2 + $0x80] sm:$0xff]
    %v96 = vld [vmem:[#allocation2 + $0x88] sm:$0xff]
    %v97 = vld [vmem:[#allocation2 + $0x90] sm:$0xff]
    %v98 = vld [vmem:[#allocation2 + $0x98] sm:$0xff]
    %v99 = vld [vmem:[#allocation2 + $0xa0] sm:$0xff]
    %v100 = vld [vmem:[#allocation2 + $0xa8] sm:$0xff]
    %v101 = vld [vmem:[#allocation2 + $0xb0] sm:$0xff]
    %v102 = vld [vmem:[#allocation2 + $0xb8] sm:$0xff]
    %v103 = vld [vmem:[#allocation2 + $0xc0] sm:$0xff]
    %v104 = vld [vmem:[#allocation2 + $0xc8] sm:$0xff]
    %v105 = vld [vmem:[#allocation2 + $0xd0] sm:$0xff]
    %v106 = vld [vmem:[#allocation2 + $0xd8] sm:$0xff]
    %v107 = vld [vmem:[#allocation2 + $0xe0] sm:$0xff]
    %v108 = vld [vmem:[#allocation2 + $0xe8] sm:$0xff]
    %v109 = vld [vmem:[#allocation2 + $0xf0] sm:$0xff]
    %v110 = vld [vmem:[#allocation2 + $0xf8] sm:$0xff]
    %v111 = vld [vmem:[%s3] sm:$0xff]
    %v113 = vlaneseq
    %v114 = vshrl.u32 %v113, 7
    %v115 = vsub.s32 0, %v114
    %v116 = vrot.slane %v111, %v115
    %v117 = vlaneseq
    %v118 = vshrl.u32 %v117, 7
    %v119 = vsub.s32 1, %v118
    %v120 = vrot.slane %v111, %v119
    %v121 = vlaneseq
    %v122 = vshrl.u32 %v121, 7
    %v123 = vsub.s32 2, %v122
    %v124 = vrot.slane %v111, %v123
    %v125 = vlaneseq
    %v126 = vshrl.u32 %v125, 7
    %v127 = vsub.s32 3, %v126
    %v128 = vrot.slane %v111, %v127
    %v129 = vlaneseq
    %v130 = vshrl.u32 %v129, 7
    %v131 = vsub.s32 4, %v130
    %v132 = vrot.slane %v111, %v131
    %v133 = vlaneseq
    %v134 = vshrl.u32 %v133, 7
    %v135 = vsub.s32 5, %v134
    %v136 = vrot.slane %v111, %v135
    %v137 = vlaneseq
    %v138 = vshrl.u32 %v137, 7
    %v139 = vsub.s32 6, %v138
    %v140 = vrot.slane %v111, %v139
    %v141 = vlaneseq
    %v142 = vshrl.u32 %v141, 7
    %v143 = vsub.s32 7, %v142
    %v144 = vrot.slane %v111, %v143
    %vm153 = vcmask 261120
    %v155 = vsel %vm153, %v78, 0
    %157 = vmatprep.subr.mxu0 0.0
    %158 = vmatpush1.msra.mxu0 0.0
    %159 = vmatprep.subr.mxu0 0.0
    %160 = vmatpush1.msra.mxu0 0.0
    %161 = vmatprep.subr.mxu0 0.0
    %162 = vmatpush1.msra.mxu0 0.0
    %163 = vmatprep.subr.mxu0 0.0
    %164 = vmatpush1.msra.mxu0 0.0
    %165 = vmatprep.subr.mxu0 0.0
    %166 = vmatpush1.msra.mxu0 0.0
    %167 = vmatprep.subr.mxu0 0.0
    %168 = vmatpush1.msra.mxu0 0.0
    %169 = vmatprep.subr.mxu0 0.0
    %170 = vmatpush1.msra.mxu0 0.0
    %171 = vmatprep.subr.mxu0 0.0
    %172 = vmatpush1.msra.mxu0 0.0
    %173 = vmatprep.subr.mxu0 0.0
    %174 = vmatpush1.msra.mxu0 0.0
    %175 = vmatprep.subr.mxu0 0.0
    %176 = vmatpush1.msra.mxu0 0.0
    %177 = vmatprep.subr.mxu0 0.0
    %178 = vmatpush1.msra.mxu0 0.0
    %179 = vmatprep.subr.mxu0 0.0
    %180 = vmatpush1.msra.mxu0 0.0
    %181 = vmatprep.subr.mxu0 %v104
    %182 = vmatpush1.msra.mxu0 %v103
    %183 = vmatprep.subr.mxu0 %v96
    %184 = vmatpush1.msra.mxu0 %v95
    %185 = vmatprep.subr.mxu0 %v88
    %186 = vmatpush1.msra.mxu0 %v87
    %187 = vmatprep.subr.mxu0 %v80
    %188 = vmatpush1.msra.mxu0 %v79
    %189 = vmatprep.subr.mxu0 0.0
    %190 = vmatpush2.msra.mxu0 0.0
    %191 = vmatprep.subr.mxu0 0.0
    %192 = vmatpush2.msra.mxu0 0.0
    %193 = vmatprep.subr.mxu0 0.0
    %194 = vmatpush2.msra.mxu0 0.0
    %195 = vmatprep.subr.mxu0 0.0
    %196 = vmatpush2.msra.mxu0 0.0
    %197 = vmatprep.subr.mxu0 0.0
    %198 = vmatpush2.msra.mxu0 0.0
    %199 = vmatprep.subr.mxu0 0.0
    %200 = vmatpush2.msra.mxu0 0.0
    %201 = vmatprep.subr.mxu0 0.0
    %202 = vmatpush2.msra.mxu0 0.0
    %203 = vmatprep.subr.mxu0 0.0
    %204 = vmatpush2.msra.mxu0 0.0
    %205 = vmatprep.subr.mxu0 0.0
    %206 = vmatpush2.msra.mxu0 0.0
    %207 = vmatprep.subr.mxu0 0.0
    %208 = vmatpush2.msra.mxu0 0.0
    %209 = vmatprep.subr.mxu0 0.0
    %210 = vmatpush2.msra.mxu0 0.0
    %211 = vmatprep.subr.mxu0 0.0
    %212 = vmatpush2.msra.mxu0 0.0
    %213 = vmatprep.subr.mxu0 0.0
    %214 = vmatpush2.msra.mxu0 0.0
    %215 = vmatprep.subr.mxu0 0.0
    %216 = vmatpush2.msra.mxu0 0.0
    %217 = vmatprep.subr.mxu0 0.0
    %218 = vmatpush2.msra.mxu0 0.0
    %219 = vmatprep.subr.mxu0 0.0
    %220 = vmatpush2.msra.mxu0 0.0
    %221 = vmatprep.mubr.f32.mxu0 0.0
    %222 = vmatmul.mubr.f32.gmra.mxu0 %v155
    %v223 = vpop.f32.mrf.mxu0
    %v224 = vadd.f32 %v116, %v223
    %v225 = vpop.f32.mrf.mxu0
    %v226 = vadd.f32 %v120, %v225
    %227 = vdwg.mxu0
    %228 = vmatprep.subr.mxu0 0.0
    %229 = vmatpush1.msra.mxu0 0.0
    %230 = vmatprep.subr.mxu0 0.0
    %231 = vmatpush1.msra.mxu0 0.0
    %232 = vmatprep.subr.mxu0 0.0
    %233 = vmatpush1.msra.mxu0 0.0
    %234 = vmatprep.subr.mxu0 0.0
    %235 = vmatpush1.msra.mxu0 0.0
    %236 = vmatprep.subr.mxu0 0.0
    %237 = vmatpush1.msra.mxu0 0.0
    %238 = vmatprep.subr.mxu0 0.0
    %239 = vmatpush1.msra.mxu0 0.0
    %240 = vmatprep.subr.mxu0 0.0
    %241 = vmatpush1.msra.mxu0 0.0
    %242 = vmatprep.subr.mxu0 0.0
    %243 = vmatpush1.msra.mxu0 0.0
    %244 = vmatprep.subr.mxu0 0.0
    %245 = vmatpush1.msra.mxu0 0.0
    %246 = vmatprep.subr.mxu0 0.0
    %247 = vmatpush1.msra.mxu0 0.0
    %248 = vmatprep.subr.mxu0 0.0
    %249 = vmatpush1.msra.mxu0 0.0
    %250 = vmatprep.subr.mxu0 0.0
    %251 = vmatpush1.msra.mxu0 0.0
    %252 = vmatprep.subr.mxu0 %v106
    %253 = vmatpush1.msra.mxu0 %v105
    %254 = vmatprep.subr.mxu0 %v98
    %255 = vmatpush1.msra.mxu0 %v97
    %256 = vmatprep.subr.mxu0 %v90
    %257 = vmatpush1.msra.mxu0 %v89
    %258 = vmatprep.subr.mxu0 %v82
    %259 = vmatpush1.msra.mxu0 %v81
    %260 = vmatprep.subr.mxu0 0.0
    %261 = vmatpush2.msra.mxu0 0.0
    %262 = vmatprep.subr.mxu0 0.0
    %263 = vmatpush2.msra.mxu0 0.0
    %264 = vmatprep.subr.mxu0 0.0
    %265 = vmatpush2.msra.mxu0 0.0
    %266 = vmatprep.subr.mxu0 0.0
    %267 = vmatpush2.msra.mxu0 0.0
    %268 = vmatprep.subr.mxu0 0.0
    %269 = vmatpush2.msra.mxu0 0.0
    %270 = vmatprep.subr.mxu0 0.0
    %271 = vmatpush2.msra.mxu0 0.0
    %272 = vmatprep.subr.mxu0 0.0
    %273 = vmatpush2.msra.mxu0 0.0
    %274 = vmatprep.subr.mxu0 0.0
    %275 = vmatpush2.msra.mxu0 0.0
    %276 = vmatprep.subr.mxu0 0.0
    %277 = vmatpush2.msra.mxu0 0.0
    %278 = vmatprep.subr.mxu0 0.0
    %279 = vmatpush2.msra.mxu0 0.0
    %280 = vmatprep.subr.mxu0 0.0
    %281 = vmatpush2.msra.mxu0 0.0
    %282 = vmatprep.subr.mxu0 0.0
    %283 = vmatpush2.msra.mxu0 0.0
    %284 = vmatprep.subr.mxu0 0.0
    %285 = vmatpush2.msra.mxu0 0.0
    %286 = vmatprep.subr.mxu0 0.0
    %287 = vmatpush2.msra.mxu0 0.0
    %288 = vmatprep.subr.mxu0 0.0
    %289 = vmatpush2.msra.mxu0 0.0
    %290 = vmatprep.subr.mxu0 0.0
    %291 = vmatpush2.msra.mxu0 0.0
    %292 = vmatprep.mubr.f32.mxu0 0.0
    %293 = vmatmul.mubr.f32.gmra.mxu0 %v155
    %v294 = vpop.f32.mrf.mxu0
    %v295 = vadd.f32 %v124, %v294
    %v296 = vpop.f32.mrf.mxu0
    %v297 = vadd.f32 %v128, %v296
    %298 = vdwg.mxu0
    %299 = vmatprep.subr.mxu0 0.0
    %300 = vmatpush1.msra.mxu0 0.0
    %301 = vmatprep.subr.mxu0 0.0
    %302 = vmatpush1.msra.mxu0 0.0
    %303 = vmatprep.subr.mxu0 0.0
    %304 = vmatpush1.msra.mxu0 0.0
    %305 = vmatprep.subr.mxu0 0.0
    %306 = vmatpush1.msra.mxu0 0.0
    %307 = vmatprep.subr.mxu0 0.0
    %308 = vmatpush1.msra.mxu0 0.0
    %309 = vmatprep.subr.mxu0 0.0
    %310 = vmatpush1.msra.mxu0 0.0
    %311 = vmatprep.subr.mxu0 0.0
    %312 = vmatpush1.msra.mxu0 0.0
    %313 = vmatprep.subr.mxu0 0.0
    %314 = vmatpush1.msra.mxu0 0.0
    %315 = vmatprep.subr.mxu0 0.0
    %316 = vmatpush1.msra.mxu0 0.0
    %317 = vmatprep.subr.mxu0 0.0
    %318 = vmatpush1.msra.mxu0 0.0
    %319 = vmatprep.subr.mxu0 0.0
    %320 = vmatpush1.msra.mxu0 0.0
    %321 = vmatprep.subr.mxu0 0.0
    %322 = vmatpush1.msra.mxu0 0.0
    %323 = vmatprep.subr.mxu0 %v108
    %324 = vmatpush1.msra.mxu0 %v107
    %325 = vmatprep.subr.mxu0 %v100
    %326 = vmatpush1.msra.mxu0 %v99
    %327 = vmatprep.subr.mxu0 %v92
    %328 = vmatpush1.msra.mxu0 %v91
    %329 = vmatprep.subr.mxu0 %v84
    %330 = vmatpush1.msra.mxu0 %v83
    %331 = vmatprep.subr.mxu0 0.0
    %332 = vmatpush2.msra.mxu0 0.0
    %333 = vmatprep.subr.mxu0 0.0
    %334 = vmatpush2.msra.mxu0 0.0
    %335 = vmatprep.subr.mxu0 0.0
    %336 = vmatpush2.msra.mxu0 0.0
    %337 = vmatprep.subr.mxu0 0.0
    %338 = vmatpush2.msra.mxu0 0.0
    %339 = vmatprep.subr.mxu0 0.0
    %340 = vmatpush2.msra.mxu0 0.0
    %341 = vmatprep.subr.mxu0 0.0
    %342 = vmatpush2.msra.mxu0 0.0
    %343 = vmatprep.subr.mxu0 0.0
    %344 = vmatpush2.msra.mxu0 0.0
    %345 = vmatprep.subr.mxu0 0.0
    %346 = vmatpush2.msra.mxu0 0.0
    %347 = vmatprep.subr.mxu0 0.0
    %348 = vmatpush2.msra.mxu0 0.0
    %349 = vmatprep.subr.mxu0 0.0
    %350 = vmatpush2.msra.mxu0 0.0
    %351 = vmatprep.subr.mxu0 0.0
    %352 = vmatpush2.msra.mxu0 0.0
    %353 = vmatprep.subr.mxu0 0.0
    %354 = vmatpush2.msra.mxu0 0.0
    %355 = vmatprep.subr.mxu0 0.0
    %356 = vmatpush2.msra.mxu0 0.0
    %357 = vmatprep.subr.mxu0 0.0
    %358 = vmatpush2.msra.mxu0 0.0
    %359 = vmatprep.subr.mxu0 0.0
    %360 = vmatpush2.msra.mxu0 0.0
    %361 = vmatprep.subr.mxu0 0.0
    %362 = vmatpush2.msra.mxu0 0.0
    %363 = vmatprep.mubr.f32.mxu0 0.0
    %364 = vmatmul.mubr.f32.gmra.mxu0 %v155
    %v365 = vpop.f32.mrf.mxu0
    %v366 = vadd.f32 %v132, %v365
    %v367 = vpop.f32.mrf.mxu0
    %v368 = vadd.f32 %v136, %v367
    %369 = vdwg.mxu0
    %370 = vmatprep.subr.mxu0 0.0
    %371 = vmatpush1.msra.mxu0 0.0
    %372 = vmatprep.subr.mxu0 0.0
    %373 = vmatpush1.msra.mxu0 0.0
    %374 = vmatprep.subr.mxu0 0.0
    %375 = vmatpush1.msra.mxu0 0.0
    %376 = vmatprep.subr.mxu0 0.0
    %377 = vmatpush1.msra.mxu0 0.0
    %378 = vmatprep.subr.mxu0 0.0
    %379 = vmatpush1.msra.mxu0 0.0
    %380 = vmatprep.subr.mxu0 0.0
    %381 = vmatpush1.msra.mxu0 0.0
    %382 = vmatprep.subr.mxu0 0.0
    %383 = vmatpush1.msra.mxu0 0.0
    %384 = vmatprep.subr.mxu0 0.0
    %385 = vmatpush1.msra.mxu0 0.0
    %386 = vmatprep.subr.mxu0 0.0
    %387 = vmatpush1.msra.mxu0 0.0
    %388 = vmatprep.subr.mxu0 0.0
    %389 = vmatpush1.msra.mxu0 0.0
    %390 = vmatprep.subr.mxu0 0.0
    %391 = vmatpush1.msra.mxu0 0.0
    %392 = vmatprep.subr.mxu0 0.0
    %393 = vmatpush1.msra.mxu0 0.0
    %394 = vmatprep.subr.mxu0 %v110
    %395 = vmatpush1.msra.mxu0 %v109
    %396 = vmatprep.subr.mxu0 %v102
    %397 = vmatpush1.msra.mxu0 %v101
    %398 = vmatprep.subr.mxu0 %v94
    %399 = vmatpush1.msra.mxu0 %v93
    %400 = vmatprep.subr.mxu0 %v86
    %401 = vmatpush1.msra.mxu0 %v85
    %402 = vmatprep.subr.mxu0 0.0
    %403 = vmatpush2.msra.mxu0 0.0
    %404 = vmatprep.subr.mxu0 0.0
    %405 = vmatpush2.msra.mxu0 0.0
    %406 = vmatprep.subr.mxu0 0.0
    %407 = vmatpush2.msra.mxu0 0.0
    %408 = vmatprep.subr.mxu0 0.0
    %409 = vmatpush2.msra.mxu0 0.0
    %410 = vmatprep.subr.mxu0 0.0
    %411 = vmatpush2.msra.mxu0 0.0
    %412 = vmatprep.subr.mxu0 0.0
    %413 = vmatpush2.msra.mxu0 0.0
    %414 = vmatprep.subr.mxu0 0.0
    %415 = vmatpush2.msra.mxu0 0.0
    %416 = vmatprep.subr.mxu0 0.0
    %417 = vmatpush2.msra.mxu0 0.0
    %418 = vmatprep.subr.mxu0 0.0
    %419 = vmatpush2.msra.mxu0 0.0
    %420 = vmatprep.subr.mxu0 0.0
    %421 = vmatpush2.msra.mxu0 0.0
    %422 = vmatprep.subr.mxu0 0.0
    %423 = vmatpush2.msra.mxu0 0.0
    %424 = vmatprep.subr.mxu0 0.0
    %425 = vmatpush2.msra.mxu0 0.0
    %426 = vmatprep.subr.mxu0 0.0
    %427 = vmatpush2.msra.mxu0 0.0
    %428 = vmatprep.subr.mxu0 0.0
    %429 = vmatpush2.msra.mxu0 0.0
    %430 = vmatprep.subr.mxu0 0.0
    %431 = vmatpush2.msra.mxu0 0.0
    %432 = vmatprep.subr.mxu0 0.0
    %433 = vmatpush2.msra.mxu0 0.0
    %434 = vmatprep.mubr.f32.mxu0 0.0
    %435 = vmatmul.mubr.f32.gmra.mxu0 %v155
    %v436 = vpop.f32.mrf.mxu0
    %v437 = vadd.f32 %v140, %v436
    %v438 = vpop.f32.mrf.mxu0
    %v439 = vadd.f32 %v144, %v438
    %440 = vdwg.mxu0
    %v441 = vld [vmem:[%s4] sm:$0xff]
    %v442 = vld [vmem:[%s4 + $0x8] sm:$0xff]
    %v443 = vld [vmem:[%s4 + $0x10] sm:$0xff]
    %v444 = vld [vmem:[%s4 + $0x18] sm:$0xff]
    %v446 = vsel %vm153, 0.0, 0
    %448 = vmatprep.subr.mxu0 0.0
    %449 = vmatpush1.msra.mxu0 0.0
    %450 = vmatprep.subr.mxu0 0.0
    %451 = vmatpush1.msra.mxu0 0.0
    %452 = vmatprep.subr.mxu0 0.0
    %453 = vmatpush1.msra.mxu0 0.0
    %454 = vmatprep.subr.mxu0 0.0
    %455 = vmatpush1.msra.mxu0 0.0
    %456 = vmatprep.subr.mxu0 0.0
    %457 = vmatpush1.msra.mxu0 0.0
    %458 = vmatprep.subr.mxu0 0.0
    %459 = vmatpush1.msra.mxu0 0.0
    %460 = vmatprep.subr.mxu0 0.0
    %461 = vmatpush1.msra.mxu0 0.0
    %462 = vmatprep.subr.mxu0 0.0
    %463 = vmatpush1.msra.mxu0 0.0
    %464 = vmatprep.subr.mxu0 0.0
    %465 = vmatpush1.msra.mxu0 0.0
    %466 = vmatprep.subr.mxu0 0.0
    %467 = vmatpush1.msra.mxu0 0.0
    %468 = vmatprep.subr.mxu0 0.0
    %469 = vmatpush1.msra.mxu0 0.0
    %470 = vmatprep.subr.mxu0 0.0
    %471 = vmatpush1.msra.mxu0 0.0
    %472 = vmatprep.subr.mxu0 0.0
    %473 = vmatpush1.msra.mxu0 %v444
    %474 = vmatprep.subr.mxu0 0.0
    %475 = vmatpush1.msra.mxu0 %v443
    %476 = vmatprep.subr.mxu0 0.0
    %477 = vmatpush1.msra.mxu0 %v442
    %478 = vmatprep.subr.mxu0 0.0
    %479 = vmatpush1.msra.mxu0 %v441
    %480 = vmatprep.subr.mxu0 0.0
    %481 = vmatpush2.msra.mxu0 0.0
    %482 = vmatprep.subr.mxu0 0.0
    %483 = vmatpush2.msra.mxu0 0.0
    %484 = vmatprep.subr.mxu0 0.0
    %485 = vmatpush2.msra.mxu0 0.0
    %486 = vmatprep.subr.mxu0 0.0
    %487 = vmatpush2.msra.mxu0 0.0
    %488 = vmatprep.subr.mxu0 0.0
    %489 = vmatpush2.msra.mxu0 0.0
    %490 = vmatprep.subr.mxu0 0.0
    %491 = vmatpush2.msra.mxu0 0.0
    %492 = vmatprep.subr.mxu0 0.0
    %493 = vmatpush2.msra.mxu0 0.0
    %494 = vmatprep.subr.mxu0 0.0
    %495 = vmatpush2.msra.mxu0 0.0
    %496 = vmatprep.subr.mxu0 0.0
    %497 = vmatpush2.msra.mxu0 0.0
    %498 = vmatprep.subr.mxu0 0.0
    %499 = vmatpush2.msra.mxu0 0.0
    %500 = vmatprep.subr.mxu0 0.0
    %501 = vmatpush2.msra.mxu0 0.0
    %502 = vmatprep.subr.mxu0 0.0
    %503 = vmatpush2.msra.mxu0 0.0
    %504 = vmatprep.subr.mxu0 0.0
    %505 = vmatpush2.msra.mxu0 0.0
    %506 = vmatprep.subr.mxu0 0.0
    %507 = vmatpush2.msra.mxu0 0.0
    %508 = vmatprep.subr.mxu0 0.0
    %509 = vmatpush2.msra.mxu0 0.0
    %510 = vmatprep.subr.mxu0 0.0
    %511 = vmatpush2.msra.mxu0 0.0
    %512 = vmatprep.mubr.f32.mxu0 0.0
    %513 = vmatmul.mubr.f32.gmra.mxu0 %v446
    %v514 = vpop.f32.mrf.mxu0
    %v515 = vadd.f32 0.0, %v514
    %v516 = vpop.f32.mrf.mxu0
    %517 = vdwg.mxu0
    %v518 = vadd.f32 %v224, %v515
    %v519 = vxor.u32 %v518, 2147483648
    %v520 = vmul.f32 %v519, 1.442695
    %v521 = vpow.pop %v520
    %v522 = vadd.f32 %v521, 1.0
    %v523 = vrcp.pop %v522
    %v524 = vmul.f32 1.0, %v523
    %v525 = vtanh.pop %v518
    %v526 = vmul.f32 %v524, 0.0
    %528 = vrot.lane.b32.xlu0 %v525, 32
    %v529 = vpop.permute.xlu0 %528
    %v531 = vmul.f32 %v524, %v529
    %533 = vrot.lane.b32.xlu0 %v531, 32
    %v534 = vpop.permute.xlu0 %533
    %v536 = vadd.f32 %v526, %v534
    %v537 = vtanh.pop %v536
    %539 = vrot.lane.b32.xlu0 %v537, 32
    %v540 = vpop.permute.xlu0 %539
    %v542 = vmul.f32 %v524, %v540
    %544 = vrot.lane.b32.xlu0 %v542, 64
    %v545 = vpop.permute.xlu0 %544
    %v546 = vsel %vm153, %v545, 0
    %548 = vmatprep.subr.mxu0 0.0
    %549 = vmatpush1.msra.mxu0 0.0
    %550 = vmatprep.subr.mxu0 0.0
    %551 = vmatpush1.msra.mxu0 0.0
    %552 = vmatprep.subr.mxu0 0.0
    %553 = vmatpush1.msra.mxu0 0.0
    %554 = vmatprep.subr.mxu0 0.0
    %555 = vmatpush1.msra.mxu0 0.0
    %556 = vmatprep.subr.mxu0 0.0
    %557 = vmatpush1.msra.mxu0 0.0
    %558 = vmatprep.subr.mxu0 0.0
    %559 = vmatpush1.msra.mxu0 0.0
    %560 = vmatprep.subr.mxu0 0.0
    %561 = vmatpush1.msra.mxu0 0.0
    %562 = vmatprep.subr.mxu0 0.0
    %563 = vmatpush1.msra.mxu0 0.0
    %564 = vmatprep.subr.mxu0 0.0
    %565 = vmatpush1.msra.mxu0 0.0
    %566 = vmatprep.subr.mxu0 0.0
    %567 = vmatpush1.msra.mxu0 0.0
    %568 = vmatprep.subr.mxu0 0.0
    %569 = vmatpush1.msra.mxu0 0.0
    %570 = vmatprep.subr.mxu0 0.0
    %571 = vmatpush1.msra.mxu0 0.0
    %572 = vmatprep.subr.mxu0 0.0
    %573 = vmatpush1.msra.mxu0 %v444
    %574 = vmatprep.subr.mxu0 0.0
    %575 = vmatpush1.msra.mxu0 %v443
    %576 = vmatprep.subr.mxu0 0.0
    %577 = vmatpush1.msra.mxu0 %v442
    %578 = vmatprep.subr.mxu0 0.0
    %579 = vmatpush1.msra.mxu0 %v441
    %580 = vmatprep.subr.mxu0 0.0
    %581 = vmatpush2.msra.mxu0 0.0
    %582 = vmatprep.subr.mxu0 0.0
    %583 = vmatpush2.msra.mxu0 0.0
    %584 = vmatprep.subr.mxu0 0.0
    %585 = vmatpush2.msra.mxu0 0.0
    %586 = vmatprep.subr.mxu0 0.0
    %587 = vmatpush2.msra.mxu0 0.0
    %588 = vmatprep.subr.mxu0 0.0
    %589 = vmatpush2.msra.mxu0 0.0
    %590 = vmatprep.subr.mxu0 0.0
    %591 = vmatpush2.msra.mxu0 0.0
    %592 = vmatprep.subr.mxu0 0.0
    %593 = vmatpush2.msra.mxu0 0.0
    %594 = vmatprep.subr.mxu0 0.0
    %595 = vmatpush2.msra.mxu0 0.0
    %596 = vmatprep.subr.mxu0 0.0
    %597 = vmatpush2.msra.mxu0 0.0
    %598 = vmatprep.subr.mxu0 0.0
    %599 = vmatpush2.msra.mxu0 0.0
    %600 = vmatprep.subr.mxu0 0.0
    %601 = vmatpush2.msra.mxu0 0.0
    %602 = vmatprep.subr.mxu0 0.0
    %603 = vmatpush2.msra.mxu0 0.0
    %604 = vmatprep.subr.mxu0 0.0
    %605 = vmatpush2.msra.mxu0 0.0
    %606 = vmatprep.subr.mxu0 0.0
    %607 = vmatpush2.msra.mxu0 0.0
    %608 = vmatprep.subr.mxu0 0.0
    %609 = vmatpush2.msra.mxu0 0.0
    %610 = vmatprep.subr.mxu0 0.0
    %611 = vmatpush2.msra.mxu0 0.0
    %612 = vmatprep.mubr.f32.mxu0 0.0
    %613 = vmatmul.mubr.f32.gmra.mxu0 %v546
    %v614 = vpop.f32.mrf.mxu0
    %v615 = vadd.f32 0.0, %v614
    %v616 = vpop.f32.mrf.mxu0
    %617 = vdwg.mxu0
    %v618 = vadd.f32 %v226, %v615
    %v619 = vxor.u32 %v618, 2147483648
    %v620 = vmul.f32 %v619, 1.442695
    %v621 = vpow.pop %v620
    %v622 = vadd.f32 %v621, 1.0
    %v623 = vrcp.pop %v622
    %v624 = vmul.f32 1.0, %v623
    %v625 = vtanh.pop %v618
    %v626 = vmul.f32 %v624, %v536
    %628 = vrot.lane.b32.xlu0 %v625, 32
    %v629 = vpop.permute.xlu0 %628
    %v631 = vmul.f32 %v624, %v629
    %633 = vrot.lane.b32.xlu0 %v631, 32
    %v634 = vpop.permute.xlu0 %633
    %v636 = vadd.f32 %v626, %v634
    %v637 = vtanh.pop %v636
    %639 = vrot.lane.b32.xlu0 %v637, 32
    %v640 = vpop.permute.xlu0 %639
    %v642 = vmul.f32 %v624, %v640
    %644 = vrot.lane.b32.xlu0 %v642, 64
    %v645 = vpop.permute.xlu0 %644
    %v646 = vsel %vm153, %v645, 0
    %648 = vmatprep.subr.mxu0 0.0
    %649 = vmatpush1.msra.mxu0 0.0
    %650 = vmatprep.subr.mxu0 0.0
    %651 = vmatpush1.msra.mxu0 0.0
    %652 = vmatprep.subr.mxu0 0.0
    %653 = vmatpush1.msra.mxu0 0.0
    %654 = vmatprep.subr.mxu0 0.0
    %655 = vmatpush1.msra.mxu0 0.0
    %656 = vmatprep.subr.mxu0 0.0
    %657 = vmatpush1.msra.mxu0 0.0
    %658 = vmatprep.subr.mxu0 0.0
    %659 = vmatpush1.msra.mxu0 0.0
    %660 = vmatprep.subr.mxu0 0.0
    %661 = vmatpush1.msra.mxu0 0.0
    %662 = vmatprep.subr.mxu0 0.0
    %663 = vmatpush1.msra.mxu0 0.0
    %664 = vmatprep.subr.mxu0 0.0
    %665 = vmatpush1.msra.mxu0 0.0
    %666 = vmatprep.subr.mxu0 0.0
    %667 = vmatpush1.msra.mxu0 0.0
    %668 = vmatprep.subr.mxu0 0.0
    %669 = vmatpush1.msra.mxu0 0.0
    %670 = vmatprep.subr.mxu0 0.0
    %671 = vmatpush1.msra.mxu0 0.0
    %672 = vmatprep.subr.mxu0 0.0
    %673 = vmatpush1.msra.mxu0 %v444
    %674 = vmatprep.subr.mxu0 0.0
    %675 = vmatpush1.msra.mxu0 %v443
    %676 = vmatprep.subr.mxu0 0.0
    %677 = vmatpush1.msra.mxu0 %v442
    %678 = vmatprep.subr.mxu0 0.0
    %679 = vmatpush1.msra.mxu0 %v441
    %680 = vmatprep.subr.mxu0 0.0
    %681 = vmatpush2.msra.mxu0 0.0
    %682 = vmatprep.subr.mxu0 0.0
    %683 = vmatpush2.msra.mxu0 0.0
    %684 = vmatprep.subr.mxu0 0.0
    %685 = vmatpush2.msra.mxu0 0.0
    %686 = vmatprep.subr.mxu0 0.0
    %687 = vmatpush2.msra.mxu0 0.0
    %688 = vmatprep.subr.mxu0 0.0
    %689 = vmatpush2.msra.mxu0 0.0
    %690 = vmatprep.subr.mxu0 0.0
    %691 = vmatpush2.msra.mxu0 0.0
    %692 = vmatprep.subr.mxu0 0.0
    %693 = vmatpush2.msra.mxu0 0.0
    %694 = vmatprep.subr.mxu0 0.0
    %695 = vmatpush2.msra.mxu0 0.0
    %696 = vmatprep.subr.mxu0 0.0
    %697 = vmatpush2.msra.mxu0 0.0
    %698 = vmatprep.subr.mxu0 0.0
    %699 = vmatpush2.msra.mxu0 0.0
    %700 = vmatprep.subr.mxu0 0.0
    %701 = vmatpush2.msra.mxu0 0.0
    %702 = vmatprep.subr.mxu0 0.0
    %703 = vmatpush2.msra.mxu0 0.0
    %704 = vmatprep.subr.mxu0 0.0
    %705 = vmatpush2.msra.mxu0 0.0
    %706 = vmatprep.subr.mxu0 0.0
    %707 = vmatpush2.msra.mxu0 0.0
    %708 = vmatprep.subr.mxu0 0.0
    %709 = vmatpush2.msra.mxu0 0.0
    %710 = vmatprep.subr.mxu0 0.0
    %711 = vmatpush2.msra.mxu0 0.0
    %712 = vmatprep.mubr.f32.mxu0 0.0
    %713 = vmatmul.mubr.f32.gmra.mxu0 %v646
    %v714 = vpop.f32.mrf.mxu0
    %v715 = vadd.f32 0.0, %v714
    %v716 = vpop.f32.mrf.mxu0
    %717 = vdwg.mxu0
    %v718 = vadd.f32 %v295, %v715
    %v719 = vxor.u32 %v718, 2147483648
    %v720 = vmul.f32 %v719, 1.442695
    %v721 = vpow.pop %v720
    %v722 = vadd.f32 %v721, 1.0
    %v723 = vrcp.pop %v722
    %v724 = vmul.f32 1.0, %v723
    %v725 = vtanh.pop %v718
    %v726 = vmul.f32 %v724, %v636
    %728 = vrot.lane.b32.xlu0 %v725, 32
    %v729 = vpop.permute.xlu0 %728
    %v731 = vmul.f32 %v724, %v729
    %733 = vrot.lane.b32.xlu0 %v731, 32
    %v734 = vpop.permute.xlu0 %733
    %v736 = vadd.f32 %v726, %v734
    %v737 = vtanh.pop %v736
    %739 = vrot.lane.b32.xlu0 %v737, 32
    %v740 = vpop.permute.xlu0 %739
    %v742 = vmul.f32 %v724, %v740
    %744 = vrot.lane.b32.xlu0 %v742, 64
    %v745 = vpop.permute.xlu0 %744
    %v746 = vsel %vm153, %v745, 0
    %748 = vmatprep.subr.mxu0 0.0
    %749 = vmatpush1.msra.mxu0 0.0
    %750 = vmatprep.subr.mxu0 0.0
    %751 = vmatpush1.msra.mxu0 0.0
    %752 = vmatprep.subr.mxu0 0.0
    %753 = vmatpush1.msra.mxu0 0.0
    %754 = vmatprep.subr.mxu0 0.0
    %755 = vmatpush1.msra.mxu0 0.0
    %756 = vmatprep.subr.mxu0 0.0
    %757 = vmatpush1.msra.mxu0 0.0
    %758 = vmatprep.subr.mxu0 0.0
    %759 = vmatpush1.msra.mxu0 0.0
    %760 = vmatprep.subr.mxu0 0.0
    %761 = vmatpush1.msra.mxu0 0.0
    %762 = vmatprep.subr.mxu0 0.0
    %763 = vmatpush1.msra.mxu0 0.0
    %764 = vmatprep.subr.mxu0 0.0
    %765 = vmatpush1.msra.mxu0 0.0
    %766 = vmatprep.subr.mxu0 0.0
    %767 = vmatpush1.msra.mxu0 0.0
    %768 = vmatprep.subr.mxu0 0.0
    %769 = vmatpush1.msra.mxu0 0.0
    %770 = vmatprep.subr.mxu0 0.0
    %771 = vmatpush1.msra.mxu0 0.0
    %772 = vmatprep.subr.mxu0 0.0
    %773 = vmatpush1.msra.mxu0 %v444
    %774 = vmatprep.subr.mxu0 0.0
    %775 = vmatpush1.msra.mxu0 %v443
    %776 = vmatprep.subr.mxu0 0.0
    %777 = vmatpush1.msra.mxu0 %v442
    %778 = vmatprep.subr.mxu0 0.0
    %779 = vmatpush1.msra.mxu0 %v441
    %780 = vmatprep.subr.mxu0 0.0
    %781 = vmatpush2.msra.mxu0 0.0
    %782 = vmatprep.subr.mxu0 0.0
    %783 = vmatpush2.msra.mxu0 0.0
    %784 = vmatprep.subr.mxu0 0.0
    %785 = vmatpush2.msra.mxu0 0.0
    %786 = vmatprep.subr.mxu0 0.0
    %787 = vmatpush2.msra.mxu0 0.0
    %788 = vmatprep.subr.mxu0 0.0
    %789 = vmatpush2.msra.mxu0 0.0
    %790 = vmatprep.subr.mxu0 0.0
    %791 = vmatpush2.msra.mxu0 0.0
    %792 = vmatprep.subr.mxu0 0.0
    %793 = vmatpush2.msra.mxu0 0.0
    %794 = vmatprep.subr.mxu0 0.0
    %795 = vmatpush2.msra.mxu0 0.0
    %796 = vmatprep.subr.mxu0 0.0
    %797 = vmatpush2.msra.mxu0 0.0
    %798 = vmatprep.subr.mxu0 0.0
    %799 = vmatpush2.msra.mxu0 0.0
    %800 = vmatprep.subr.mxu0 0.0
    %801 = vmatpush2.msra.mxu0 0.0
    %802 = vmatprep.subr.mxu0 0.0
    %803 = vmatpush2.msra.mxu0 0.0
    %804 = vmatprep.subr.mxu0 0.0
    %805 = vmatpush2.msra.mxu0 0.0
    %806 = vmatprep.subr.mxu0 0.0
    %807 = vmatpush2.msra.mxu0 0.0
    %808 = vmatprep.subr.mxu0 0.0
    %809 = vmatpush2.msra.mxu0 0.0
    %810 = vmatprep.subr.mxu0 0.0
    %811 = vmatpush2.msra.mxu0 0.0
    %812 = vmatprep.mubr.f32.mxu0 0.0
    %813 = vmatmul.mubr.f32.gmra.mxu0 %v746
    %v814 = vpop.f32.mrf.mxu0
    %v815 = vadd.f32 0.0, %v814
    %v816 = vpop.f32.mrf.mxu0
    %817 = vdwg.mxu0
    %v818 = vadd.f32 %v297, %v815
    %v819 = vxor.u32 %v818, 2147483648
    %v820 = vmul.f32 %v819, 1.442695
    %v821 = vpow.pop %v820
    %v822 = vadd.f32 %v821, 1.0
    %v823 = vrcp.pop %v822
    %v824 = vmul.f32 1.0, %v823
    %v825 = vtanh.pop %v818
    %v826 = vmul.f32 %v824, %v736
    %828 = vrot.lane.b32.xlu0 %v825, 32
    %v829 = vpop.permute.xlu0 %828
    %v831 = vmul.f32 %v824, %v829
    %833 = vrot.lane.b32.xlu0 %v831, 32
    %v834 = vpop.permute.xlu0 %833
    %v836 = vadd.f32 %v826, %v834
    %v837 = vtanh.pop %v836
    %839 = vrot.lane.b32.xlu0 %v837, 32
    %v840 = vpop.permute.xlu0 %839
    %v842 = vmul.f32 %v824, %v840
    %844 = vrot.lane.b32.xlu0 %v842, 64
    %v845 = vpop.permute.xlu0 %844
    %v846 = vsel %vm153, %v845, 0
    %848 = vmatprep.subr.mxu0 0.0
    %849 = vmatpush1.msra.mxu0 0.0
    %850 = vmatprep.subr.mxu0 0.0
    %851 = vmatpush1.msra.mxu0 0.0
    %852 = vmatprep.subr.mxu0 0.0
    %853 = vmatpush1.msra.mxu0 0.0
    %854 = vmatprep.subr.mxu0 0.0
    %855 = vmatpush1.msra.mxu0 0.0
    %856 = vmatprep.subr.mxu0 0.0
    %857 = vmatpush1.msra.mxu0 0.0
    %858 = vmatprep.subr.mxu0 0.0
    %859 = vmatpush1.msra.mxu0 0.0
    %860 = vmatprep.subr.mxu0 0.0
    %861 = vmatpush1.msra.mxu0 0.0
    %862 = vmatprep.subr.mxu0 0.0
    %863 = vmatpush1.msra.mxu0 0.0
    %864 = vmatprep.subr.mxu0 0.0
    %865 = vmatpush1.msra.mxu0 0.0
    %866 = vmatprep.subr.mxu0 0.0
    %867 = vmatpush1.msra.mxu0 0.0
    %868 = vmatprep.subr.mxu0 0.0
    %869 = vmatpush1.msra.mxu0 0.0
    %870 = vmatprep.subr.mxu0 0.0
    %871 = vmatpush1.msra.mxu0 0.0
    %872 = vmatprep.subr.mxu0 0.0
    %873 = vmatpush1.msra.mxu0 %v444
    %874 = vmatprep.subr.mxu0 0.0
    %875 = vmatpush1.msra.mxu0 %v443
    %876 = vmatprep.subr.mxu0 0.0
    %877 = vmatpush1.msra.mxu0 %v442
    %878 = vmatprep.subr.mxu0 0.0
    %879 = vmatpush1.msra.mxu0 %v441
    %880 = vmatprep.subr.mxu0 0.0
    %881 = vmatpush2.msra.mxu0 0.0
    %882 = vmatprep.subr.mxu0 0.0
    %883 = vmatpush2.msra.mxu0 0.0
    %884 = vmatprep.subr.mxu0 0.0
    %885 = vmatpush2.msra.mxu0 0.0
    %886 = vmatprep.subr.mxu0 0.0
    %887 = vmatpush2.msra.mxu0 0.0
    %888 = vmatprep.subr.mxu0 0.0
    %889 = vmatpush2.msra.mxu0 0.0
    %890 = vmatprep.subr.mxu0 0.0
    %891 = vmatpush2.msra.mxu0 0.0
    %892 = vmatprep.subr.mxu0 0.0
    %893 = vmatpush2.msra.mxu0 0.0
    %894 = vmatprep.subr.mxu0 0.0
    %895 = vmatpush2.msra.mxu0 0.0
    %896 = vmatprep.subr.mxu0 0.0
    %897 = vmatpush2.msra.mxu0 0.0
    %898 = vmatprep.subr.mxu0 0.0
    %899 = vmatpush2.msra.mxu0 0.0
    %900 = vmatprep.subr.mxu0 0.0
    %901 = vmatpush2.msra.mxu0 0.0
    %902 = vmatprep.subr.mxu0 0.0
    %903 = vmatpush2.msra.mxu0 0.0
    %904 = vmatprep.subr.mxu0 0.0
    %905 = vmatpush2.msra.mxu0 0.0
    %906 = vmatprep.subr.mxu0 0.0
    %907 = vmatpush2.msra.mxu0 0.0
    %908 = vmatprep.subr.mxu0 0.0
    %909 = vmatpush2.msra.mxu0 0.0
    %910 = vmatprep.subr.mxu0 0.0
    %911 = vmatpush2.msra.mxu0 0.0
    %912 = vmatprep.mubr.f32.mxu0 0.0
    %913 = vmatmul.mubr.f32.gmra.mxu0 %v846
    %v914 = vpop.f32.mrf.mxu0
    %v915 = vadd.f32 0.0, %v914
    %v916 = vpop.f32.mrf.mxu0
    %917 = vdwg.mxu0
    %v918 = vadd.f32 %v366, %v915
    %v919 = vxor.u32 %v918, 2147483648
    %v920 = vmul.f32 %v919, 1.442695
    %v921 = vpow.pop %v920
    %v922 = vadd.f32 %v921, 1.0
    %v923 = vrcp.pop %v922
    %v924 = vmul.f32 1.0, %v923
    %v925 = vtanh.pop %v918
    %v926 = vmul.f32 %v924, %v836
    %928 = vrot.lane.b32.xlu0 %v925, 32
    %v929 = vpop.permute.xlu0 %928
    %v931 = vmul.f32 %v924, %v929
    %933 = vrot.lane.b32.xlu0 %v931, 32
    %v934 = vpop.permute.xlu0 %933
    %v936 = vadd.f32 %v926, %v934
    %v937 = vtanh.pop %v936
    %939 = vrot.lane.b32.xlu0 %v937, 32
    %v940 = vpop.permute.xlu0 %939
    %v942 = vmul.f32 %v924, %v940
    %944 = vrot.lane.b32.xlu0 %v942, 64
    %v945 = vpop.permute.xlu0 %944
    %v946 = vsel %vm153, %v945, 0
    %948 = vmatprep.subr.mxu0 0.0
    %949 = vmatpush1.msra.mxu0 0.0
    %950 = vmatprep.subr.mxu0 0.0
    %951 = vmatpush1.msra.mxu0 0.0
    %952 = vmatprep.subr.mxu0 0.0
    %953 = vmatpush1.msra.mxu0 0.0
    %954 = vmatprep.subr.mxu0 0.0
    %955 = vmatpush1.msra.mxu0 0.0
    %956 = vmatprep.subr.mxu0 0.0
    %957 = vmatpush1.msra.mxu0 0.0
    %958 = vmatprep.subr.mxu0 0.0
    %959 = vmatpush1.msra.mxu0 0.0
    %960 = vmatprep.subr.mxu0 0.0
    %961 = vmatpush1.msra.mxu0 0.0
    %962 = vmatprep.subr.mxu0 0.0
    %963 = vmatpush1.msra.mxu0 0.0
    %964 = vmatprep.subr.mxu0 0.0
    %965 = vmatpush1.msra.mxu0 0.0
    %966 = vmatprep.subr.mxu0 0.0
    %967 = vmatpush1.msra.mxu0 0.0
    %968 = vmatprep.subr.mxu0 0.0
    %969 = vmatpush1.msra.mxu0 0.0
    %970 = vmatprep.subr.mxu0 0.0
    %971 = vmatpush1.msra.mxu0 0.0
    %972 = vmatprep.subr.mxu0 0.0
    %973 = vmatpush1.msra.mxu0 %v444
    %974 = vmatprep.subr.mxu0 0.0
    %975 = vmatpush1.msra.mxu0 %v443
    %976 = vmatprep.subr.mxu0 0.0
    %977 = vmatpush1.msra.mxu0 %v442
    %978 = vmatprep.subr.mxu0 0.0
    %979 = vmatpush1.msra.mxu0 %v441
    %980 = vmatprep.subr.mxu0 0.0
    %981 = vmatpush2.msra.mxu0 0.0
    %982 = vmatprep.subr.mxu0 0.0
    %983 = vmatpush2.msra.mxu0 0.0
    %984 = vmatprep.subr.mxu0 0.0
    %985 = vmatpush2.msra.mxu0 0.0
    %986 = vmatprep.subr.mxu0 0.0
    %987 = vmatpush2.msra.mxu0 0.0
    %988 = vmatprep.subr.mxu0 0.0
    %989 = vmatpush2.msra.mxu0 0.0
    %990 = vmatprep.subr.mxu0 0.0
    %991 = vmatpush2.msra.mxu0 0.0
    %992 = vmatprep.subr.mxu0 0.0
    %993 = vmatpush2.msra.mxu0 0.0
    %994 = vmatprep.subr.mxu0 0.0
    %995 = vmatpush2.msra.mxu0 0.0
    %996 = vmatprep.subr.mxu0 0.0
    %997 = vmatpush2.msra.mxu0 0.0
    %998 = vmatprep.subr.mxu0 0.0
    %999 = vmatpush2.msra.mxu0 0.0
    %1000 = vmatprep.subr.mxu0 0.0
    %1001 = vmatpush2.msra.mxu0 0.0
    %1002 = vmatprep.subr.mxu0 0.0
    %1003 = vmatpush2.msra.mxu0 0.0
    %1004 = vmatprep.subr.mxu0 0.0
    %1005 = vmatpush2.msra.mxu0 0.0
    %1006 = vmatprep.subr.mxu0 0.0
    %1007 = vmatpush2.msra.mxu0 0.0
    %1008 = vmatprep.subr.mxu0 0.0
    %1009 = vmatpush2.msra.mxu0 0.0
    %1010 = vmatprep.subr.mxu0 0.0
    %1011 = vmatpush2.msra.mxu0 0.0
    %1012 = vmatprep.mubr.f32.mxu0 0.0
    %1013 = vmatmul.mubr.f32.gmra.mxu0 %v946
    %v1014 = vpop.f32.mrf.mxu0
    %v1015 = vadd.f32 0.0, %v1014
    %v1016 = vpop.f32.mrf.mxu0
    %1017 = vdwg.mxu0
    %v1018 = vadd.f32 %v368, %v1015
    %v1019 = vxor.u32 %v1018, 2147483648
    %v1020 = vmul.f32 %v1019, 1.442695
    %v1021 = vpow.pop %v1020
    %v1022 = vadd.f32 %v1021, 1.0
    %v1023 = vrcp.pop %v1022
    %v1024 = vmul.f32 1.0, %v1023
    %v1025 = vtanh.pop %v1018
    %v1026 = vmul.f32 %v1024, %v936
    %1028 = vrot.lane.b32.xlu0 %v1025, 32
    %v1029 = vpop.permute.xlu0 %1028
    %v1031 = vmul.f32 %v1024, %v1029
    %1033 = vrot.lane.b32.xlu0 %v1031, 32
    %v1034 = vpop.permute.xlu0 %1033
    %v1036 = vadd.f32 %v1026, %v1034
    %v1037 = vtanh.pop %v1036
    %1039 = vrot.lane.b32.xlu0 %v1037, 32
    %v1040 = vpop.permute.xlu0 %1039
    %v1042 = vmul.f32 %v1024, %v1040
    %1044 = vrot.lane.b32.xlu0 %v1042, 64
    %v1045 = vpop.permute.xlu0 %1044
    %v1046 = vsel %vm153, %v1045, 0
    %1048 = vmatprep.subr.mxu0 0.0
    %1049 = vmatpush1.msra.mxu0 0.0
    %1050 = vmatprep.subr.mxu0 0.0
    %1051 = vmatpush1.msra.mxu0 0.0
    %1052 = vmatprep.subr.mxu0 0.0
    %1053 = vmatpush1.msra.mxu0 0.0
    %1054 = vmatprep.subr.mxu0 0.0
    %1055 = vmatpush1.msra.mxu0 0.0
    %1056 = vmatprep.subr.mxu0 0.0
    %1057 = vmatpush1.msra.mxu0 0.0
    %1058 = vmatprep.subr.mxu0 0.0
    %1059 = vmatpush1.msra.mxu0 0.0
    %1060 = vmatprep.subr.mxu0 0.0
    %1061 = vmatpush1.msra.mxu0 0.0
    %1062 = vmatprep.subr.mxu0 0.0
    %1063 = vmatpush1.msra.mxu0 0.0
    %1064 = vmatprep.subr.mxu0 0.0
    %1065 = vmatpush1.msra.mxu0 0.0
    %1066 = vmatprep.subr.mxu0 0.0
    %1067 = vmatpush1.msra.mxu0 0.0
    %1068 = vmatprep.subr.mxu0 0.0
    %1069 = vmatpush1.msra.mxu0 0.0
    %1070 = vmatprep.subr.mxu0 0.0
    %1071 = vmatpush1.msra.mxu0 0.0
    %1072 = vmatprep.subr.mxu0 0.0
    %1073 = vmatpush1.msra.mxu0 %v444
    %1074 = vmatprep.subr.mxu0 0.0
    %1075 = vmatpush1.msra.mxu0 %v443
    %1076 = vmatprep.subr.mxu0 0.0
    %1077 = vmatpush1.msra.mxu0 %v442
    %1078 = vmatprep.subr.mxu0 0.0
    %1079 = vmatpush1.msra.mxu0 %v441
    %1080 = vmatprep.subr.mxu0 0.0
    %1081 = vmatpush2.msra.mxu0 0.0
    %1082 = vmatprep.subr.mxu0 0.0
    %1083 = vmatpush2.msra.mxu0 0.0
    %1084 = vmatprep.subr.mxu0 0.0
    %1085 = vmatpush2.msra.mxu0 0.0
    %1086 = vmatprep.subr.mxu0 0.0
    %1087 = vmatpush2.msra.mxu0 0.0
    %1088 = vmatprep.subr.mxu0 0.0
    %1089 = vmatpush2.msra.mxu0 0.0
    %1090 = vmatprep.subr.mxu0 0.0
    %1091 = vmatpush2.msra.mxu0 0.0
    %1092 = vmatprep.subr.mxu0 0.0
    %1093 = vmatpush2.msra.mxu0 0.0
    %1094 = vmatprep.subr.mxu0 0.0
    %1095 = vmatpush2.msra.mxu0 0.0
    %1096 = vmatprep.subr.mxu0 0.0
    %1097 = vmatpush2.msra.mxu0 0.0
    %1098 = vmatprep.subr.mxu0 0.0
    %1099 = vmatpush2.msra.mxu0 0.0
    %1100 = vmatprep.subr.mxu0 0.0
    %1101 = vmatpush2.msra.mxu0 0.0
    %1102 = vmatprep.subr.mxu0 0.0
    %1103 = vmatpush2.msra.mxu0 0.0
    %1104 = vmatprep.subr.mxu0 0.0
    %1105 = vmatpush2.msra.mxu0 0.0
    %1106 = vmatprep.subr.mxu0 0.0
    %1107 = vmatpush2.msra.mxu0 0.0
    %1108 = vmatprep.subr.mxu0 0.0
    %1109 = vmatpush2.msra.mxu0 0.0
    %1110 = vmatprep.subr.mxu0 0.0
    %1111 = vmatpush2.msra.mxu0 0.0
    %1112 = vmatprep.mubr.f32.mxu0 0.0
    %1113 = vmatmul.mubr.f32.gmra.mxu0 %v1046
    %v1114 = vpop.f32.mrf.mxu0
    %v1115 = vadd.f32 0.0, %v1114
    %v1116 = vpop.f32.mrf.mxu0
    %1117 = vdwg.mxu0
    %v1118 = vadd.f32 %v437, %v1115
    %v1119 = vxor.u32 %v1118, 2147483648
    %v1120 = vmul.f32 %v1119, 1.442695
    %v1121 = vpow.pop %v1120
    %v1122 = vadd.f32 %v1121, 1.0
    %v1123 = vrcp.pop %v1122
    %v1124 = vmul.f32 1.0, %v1123
    %v1125 = vtanh.pop %v1118
    %v1126 = vmul.f32 %v1124, %v1036
    %1128 = vrot.lane.b32.xlu0 %v1125, 32
    %v1129 = vpop.permute.xlu0 %1128
    %v1131 = vmul.f32 %v1124, %v1129
    %1133 = vrot.lane.b32.xlu0 %v1131, 32
    %v1134 = vpop.permute.xlu0 %1133
    %v1136 = vadd.f32 %v1126, %v1134
    %v1137 = vtanh.pop %v1136
    %1139 = vrot.lane.b32.xlu0 %v1137, 32
    %v1140 = vpop.permute.xlu0 %1139
    %v1142 = vmul.f32 %v1124, %v1140
    %1144 = vrot.lane.b32.xlu0 %v1142, 64
    %v1145 = vpop.permute.xlu0 %1144
    %v1146 = vsel %vm153, %v1145, 0
    %1148 = vmatprep.subr.mxu0 0.0
    %1149 = vmatpush1.msra.mxu0 0.0
    %1150 = vmatprep.subr.mxu0 0.0
    %1151 = vmatpush1.msra.mxu0 0.0
    %1152 = vmatprep.subr.mxu0 0.0
    %1153 = vmatpush1.msra.mxu0 0.0
    %1154 = vmatprep.subr.mxu0 0.0
    %1155 = vmatpush1.msra.mxu0 0.0
    %1156 = vmatprep.subr.mxu0 0.0
    %1157 = vmatpush1.msra.mxu0 0.0
    %1158 = vmatprep.subr.mxu0 0.0
    %1159 = vmatpush1.msra.mxu0 0.0
    %1160 = vmatprep.subr.mxu0 0.0
    %1161 = vmatpush1.msra.mxu0 0.0
    %1162 = vmatprep.subr.mxu0 0.0
    %1163 = vmatpush1.msra.mxu0 0.0
    %1164 = vmatprep.subr.mxu0 0.0
    %1165 = vmatpush1.msra.mxu0 0.0
    %1166 = vmatprep.subr.mxu0 0.0
    %1167 = vmatpush1.msra.mxu0 0.0
    %1168 = vmatprep.subr.mxu0 0.0
    %1169 = vmatpush1.msra.mxu0 0.0
    %1170 = vmatprep.subr.mxu0 0.0
    %1171 = vmatpush1.msra.mxu0 0.0
    %1172 = vmatprep.subr.mxu0 0.0
    %1173 = vmatpush1.msra.mxu0 %v444
    %1174 = vmatprep.subr.mxu0 0.0
    %1175 = vmatpush1.msra.mxu0 %v443
    %1176 = vmatprep.subr.mxu0 0.0
    %1177 = vmatpush1.msra.mxu0 %v442
    %1178 = vmatprep.subr.mxu0 0.0
    %1179 = vmatpush1.msra.mxu0 %v441
    %1180 = vmatprep.subr.mxu0 0.0
    %1181 = vmatpush2.msra.mxu0 0.0
    %1182 = vmatprep.subr.mxu0 0.0
    %1183 = vmatpush2.msra.mxu0 0.0
    %1184 = vmatprep.subr.mxu0 0.0
    %1185 = vmatpush2.msra.mxu0 0.0
    %1186 = vmatprep.subr.mxu0 0.0
    %1187 = vmatpush2.msra.mxu0 0.0
    %1188 = vmatprep.subr.mxu0 0.0
    %1189 = vmatpush2.msra.mxu0 0.0
    %1190 = vmatprep.subr.mxu0 0.0
    %1191 = vmatpush2.msra.mxu0 0.0
    %1192 = vmatprep.subr.mxu0 0.0
    %1193 = vmatpush2.msra.mxu0 0.0
    %1194 = vmatprep.subr.mxu0 0.0
    %1195 = vmatpush2.msra.mxu0 0.0
    %1196 = vmatprep.subr.mxu0 0.0
    %1197 = vmatpush2.msra.mxu0 0.0
    %1198 = vmatprep.subr.mxu0 0.0
    %1199 = vmatpush2.msra.mxu0 0.0
    %1200 = vmatprep.subr.mxu0 0.0
    %1201 = vmatpush2.msra.mxu0 0.0
    %1202 = vmatprep.subr.mxu0 0.0
    %1203 = vmatpush2.msra.mxu0 0.0
    %1204 = vmatprep.subr.mxu0 0.0
    %1205 = vmatpush2.msra.mxu0 0.0
    %1206 = vmatprep.subr.mxu0 0.0
    %1207 = vmatpush2.msra.mxu0 0.0
    %1208 = vmatprep.subr.mxu0 0.0
    %1209 = vmatpush2.msra.mxu0 0.0
    %1210 = vmatprep.subr.mxu0 0.0
    %1211 = vmatpush2.msra.mxu0 0.0
    %1212 = vmatprep.mubr.f32.mxu0 0.0
    %1213 = vmatmul.mubr.f32.gmra.mxu0 %v1146
    %v1214 = vpop.f32.mrf.mxu0
    %v1215 = vadd.f32 0.0, %v1214
    %v1216 = vpop.f32.mrf.mxu0
    %1217 = vdwg.mxu0
    %v1218 = vadd.f32 %v439, %v1215
    %v1219 = vxor.u32 %v1218, 2147483648
    %v1220 = vmul.f32 %v1219, 1.442695
    %v1221 = vpow.pop %v1220
    %v1222 = vadd.f32 %v1221, 1.0
    %v1223 = vrcp.pop %v1222
    %v1224 = vmul.f32 1.0, %v1223
    %v1225 = vtanh.pop %v1218
    %v1226 = vmul.f32 %v1224, %v1136
    %1228 = vrot.lane.b32.xlu0 %v1225, 32
    %v1229 = vpop.permute.xlu0 %1228
    %v1231 = vmul.f32 %v1224, %v1229
    %1233 = vrot.lane.b32.xlu0 %v1231, 32
    %v1234 = vpop.permute.xlu0 %1233
    %v1236 = vadd.f32 %v1226, %v1234
    %v1237 = vtanh.pop %v1236
    %1239 = vrot.lane.b32.xlu0 %v1237, 32
    %v1240 = vpop.permute.xlu0 %1239
    %v1242 = vmul.f32 %v1224, %v1240
    %v1243 = vld [vmem:[%s5] sm:$0xff]
    %v1244 = vld [vmem:[%s5 + $0x8] sm:$0xff]
    %v1245 = vld [vmem:[%s5 + $0x10] sm:$0xff]
    %v1246 = vld [vmem:[%s5 + $0x18] sm:$0xff]
    %v1247 = vld [vmem:[%s6] sm:$0x1]
    %v1249 = vlaneseq
    %v1250 = vshrl.u32 %v1249, 7
    %v1251 = vsub.s32 0, %v1250
    %v1252 = vrot.slane %v1247, %v1251
    %1255 = vrot.lane.b32.xlu0 %v1242, 64
    %v1256 = vpop.permute.xlu0 %1255
    %v1257 = vsel %vm153, %v1256, 0
    %1259 = vmatprep.subr.mxu0 0.0
    %1260 = vmatpush1.msra.mxu0 0.0
    %1261 = vmatprep.subr.mxu0 0.0
    %1262 = vmatpush1.msra.mxu0 0.0
    %1263 = vmatprep.subr.mxu0 0.0
    %1264 = vmatpush1.msra.mxu0 0.0
    %1265 = vmatprep.subr.mxu0 0.0
    %1266 = vmatpush1.msra.mxu0 0.0
    %1267 = vmatprep.subr.mxu0 0.0
    %1268 = vmatpush1.msra.mxu0 0.0
    %1269 = vmatprep.subr.mxu0 0.0
    %1270 = vmatpush1.msra.mxu0 0.0
    %1271 = vmatprep.subr.mxu0 0.0
    %1272 = vmatpush1.msra.mxu0 0.0
    %1273 = vmatprep.subr.mxu0 0.0
    %1274 = vmatpush1.msra.mxu0 0.0
    %1275 = vmatprep.subr.mxu0 0.0
    %1276 = vmatpush1.msra.mxu0 0.0
    %1277 = vmatprep.subr.mxu0 0.0
    %1278 = vmatpush1.msra.mxu0 0.0
    %1279 = vmatprep.subr.mxu0 0.0
    %1280 = vmatpush1.msra.mxu0 0.0
    %1281 = vmatprep.subr.mxu0 0.0
    %1282 = vmatpush1.msra.mxu0 0.0
    %1283 = vmatprep.subr.mxu0 0.0
    %1284 = vmatpush1.msra.mxu0 %v1246
    %1285 = vmatprep.subr.mxu0 0.0
    %1286 = vmatpush1.msra.mxu0 %v1245
    %1287 = vmatprep.subr.mxu0 0.0
    %1288 = vmatpush1.msra.mxu0 %v1244
    %1289 = vmatprep.subr.mxu0 0.0
    %1290 = vmatpush1.msra.mxu0 %v1243
    %1291 = vmatprep.subr.mxu0 0.0
    %1292 = vmatpush2.msra.mxu0 0.0
    %1293 = vmatprep.subr.mxu0 0.0
    %1294 = vmatpush2.msra.mxu0 0.0
    %1295 = vmatprep.subr.mxu0 0.0
    %1296 = vmatpush2.msra.mxu0 0.0
    %1297 = vmatprep.subr.mxu0 0.0
    %1298 = vmatpush2.msra.mxu0 0.0
    %1299 = vmatprep.subr.mxu0 0.0
    %1300 = vmatpush2.msra.mxu0 0.0
    %1301 = vmatprep.subr.mxu0 0.0
    %1302 = vmatpush2.msra.mxu0 0.0
    %1303 = vmatprep.subr.mxu0 0.0
    %1304 = vmatpush2.msra.mxu0 0.0
    %1305 = vmatprep.subr.mxu0 0.0
    %1306 = vmatpush2.msra.mxu0 0.0
    %1307 = vmatprep.subr.mxu0 0.0
    %1308 = vmatpush2.msra.mxu0 0.0
    %1309 = vmatprep.subr.mxu0 0.0
    %1310 = vmatpush2.msra.mxu0 0.0
    %1311 = vmatprep.subr.mxu0 0.0
    %1312 = vmatpush2.msra.mxu0 0.0
    %1313 = vmatprep.subr.mxu0 0.0
    %1314 = vmatpush2.msra.mxu0 0.0
    %1315 = vmatprep.subr.mxu0 0.0
    %1316 = vmatpush2.msra.mxu0 0.0
    %1317 = vmatprep.subr.mxu0 0.0
    %1318 = vmatpush2.msra.mxu0 0.0
    %1319 = vmatprep.subr.mxu0 0.0
    %1320 = vmatpush2.msra.mxu0 0.0
    %1321 = vmatprep.subr.mxu0 0.0
    %1322 = vmatpush2.msra.mxu0 0.0
    %1323 = vmatprep.mubr.f32.mxu0 0.0
    %1324 = vmatmul.mubr.f32.gmra.mxu0 %v1257
    %v1325 = vpop.f32.mrf.mxu0
    %v1326 = vadd.f32 %v1252, %v1325
    %v1327 = vpop.f32.mrf.mxu0
    %1328 = vdwg.mxu0
    %v1329 = vld [vmem:[%s7] sm:$0xff]
    %v1330 = vld [vmem:[%s7 + $0x8] sm:$0xff]
    %v1331 = vld [vmem:[%s7 + $0x10] sm:$0xff]
    %v1332 = vld [vmem:[%s7 + $0x18] sm:$0xff]
    %v1333 = vld [vmem:[%s8] sm:$0x1]
    %v1335 = vlaneseq
    %v1336 = vshrl.u32 %v1335, 7
    %v1337 = vsub.s32 0, %v1336
    %v1338 = vrot.slane %v1333, %v1337
    %1340 = vmatprep.subr.mxu0 0.0
    %1341 = vmatpush1.msra.mxu0 0.0
    %1342 = vmatprep.subr.mxu0 0.0
    %1343 = vmatpush1.msra.mxu0 0.0
    %1344 = vmatprep.subr.mxu0 0.0
    %1345 = vmatpush1.msra.mxu0 0.0
    %1346 = vmatprep.subr.mxu0 0.0
    %1347 = vmatpush1.msra.mxu0 0.0
    %1348 = vmatprep.subr.mxu0 0.0
    %1349 = vmatpush1.msra.mxu0 0.0
    %1350 = vmatprep.subr.mxu0 0.0
    %1351 = vmatpush1.msra.mxu0 0.0
    %1352 = vmatprep.subr.mxu0 0.0
    %1353 = vmatpush1.msra.mxu0 0.0
    %1354 = vmatprep.subr.mxu0 0.0
    %1355 = vmatpush1.msra.mxu0 0.0
    %1356 = vmatprep.subr.mxu0 0.0
    %1357 = vmatpush1.msra.mxu0 0.0
    %1358 = vmatprep.subr.mxu0 0.0
    %1359 = vmatpush1.msra.mxu0 0.0
    %1360 = vmatprep.subr.mxu0 0.0
    %1361 = vmatpush1.msra.mxu0 0.0
    %1362 = vmatprep.subr.mxu0 0.0
    %1363 = vmatpush1.msra.mxu0 0.0
    %1364 = vmatprep.subr.mxu0 0.0
    %1365 = vmatpush1.msra.mxu0 %v1332
    %1366 = vmatprep.subr.mxu0 0.0
    %1367 = vmatpush1.msra.mxu0 %v1331
    %1368 = vmatprep.subr.mxu0 0.0
    %1369 = vmatpush1.msra.mxu0 %v1330
    %1370 = vmatprep.subr.mxu0 0.0
    %1371 = vmatpush1.msra.mxu0 %v1329
    %1372 = vmatprep.subr.mxu0 0.0
    %1373 = vmatpush2.msra.mxu0 0.0
    %1374 = vmatprep.subr.mxu0 0.0
    %1375 = vmatpush2.msra.mxu0 0.0
    %1376 = vmatprep.subr.mxu0 0.0
    %1377 = vmatpush2.msra.mxu0 0.0
    %1378 = vmatprep.subr.mxu0 0.0
    %1379 = vmatpush2.msra.mxu0 0.0
    %1380 = vmatprep.subr.mxu0 0.0
    %1381 = vmatpush2.msra.mxu0 0.0
    %1382 = vmatprep.subr.mxu0 0.0
    %1383 = vmatpush2.msra.mxu0 0.0
    %1384 = vmatprep.subr.mxu0 0.0
    %1385 = vmatpush2.msra.mxu0 0.0
    %1386 = vmatprep.subr.mxu0 0.0
    %1387 = vmatpush2.msra.mxu0 0.0
    %1388 = vmatprep.subr.mxu0 0.0
    %1389 = vmatpush2.msra.mxu0 0.0
    %1390 = vmatprep.subr.mxu0 0.0
    %1391 = vmatpush2.msra.mxu0 0.0
    %1392 = vmatprep.subr.mxu0 0.0
    %1393 = vmatpush2.msra.mxu0 0.0
    %1394 = vmatprep.subr.mxu0 0.0
    %1395 = vmatpush2.msra.mxu0 0.0
    %1396 = vmatprep.subr.mxu0 0.0
    %1397 = vmatpush2.msra.mxu0 0.0
    %1398 = vmatprep.subr.mxu0 0.0
    %1399 = vmatpush2.msra.mxu0 0.0
    %1400 = vmatprep.subr.mxu0 0.0
    %1401 = vmatpush2.msra.mxu0 0.0
    %1402 = vmatprep.subr.mxu0 0.0
    %1403 = vmatpush2.msra.mxu0 0.0
    %1404 = vmatprep.mubr.f32.mxu0 0.0
    %1405 = vmatmul.mubr.f32.gmra.mxu0 %v1257
    %v1406 = vpop.f32.mrf.mxu0
    %v1407 = vadd.f32 %v1338, %v1406
    %v1408 = vpop.f32.mrf.mxu0
    %1409 = vdwg.mxu0
    %v1410 = vld [vmem:[%s1] sm:$0x3]
    %v1411 = vmul.f32 %v1407, %v1410
    %v1412 = vadd.f32 %v1326, %v1411
    %v1413 = vmul.f32 %v1407, %v1407
    %v1414 = vmul.f32 %v1326, %v1326
    %v1415 = vadd.f32 %v1413, %v1414
    %v1416 = vlog2.pop %v1413
    %v1417 = vmul.f32 %v1416, 0.6931472
    %v1418 = vsub.f32 %v1415, %v1417
    %v1419 = vsub.f32 %v1418, 1.0
    %vm1420 = vcmask 123904
    %v1421 = vsel %vm1420, %v1419, 0.0
    %1422 = vadd.xlane.f32.xlu0 %v1421
    %v1423 = vpop.xlane.xlu0 %1422
    %vm1424 = vcmask 1041408
    %v1425 = vsel %vm1424, %v1423, 0.0
    %v1426 = vrot.slane %v1425, 4
    %v1427 = vadd.f32 %v1425, %v1426
    %v1428 = vrot.slane %v1427, 2
    %v1429 = vadd.f32 %v1427, %v1428
    %v1430 = vrot.slane %v1429, 1
    %v1431 = vadd.f32 %v1429, %v1430
    %v1432 = vmul.f32 %v1431, 0.5
    %vm1433 = vcmask 0
    %1434 = vst.msk [vmem:[#allocation7] sm:$0x1] %vm1433, %v1432
    %v1435 = vld [vmem:[%s9] sm:$0xff]
    %v1436 = vld [vmem:[%s9 + $0x8] sm:$0xff]
    %v1437 = vld [vmem:[%s9 + $0x10] sm:$0xff]
    %v1438 = vld [vmem:[%s9 + $0x18] sm:$0xff]
    %v1439 = vld [vmem:[%s10] sm:$0x3]
    %v1441 = vlaneseq
    %v1442 = vshrl.u32 %v1441, 7
    %v1443 = vsub.s32 0, %v1442
    %v1444 = vrot.slane %v1439, %v1443
    %v1445 = vlaneseq
    %v1446 = vshrl.u32 %v1445, 7
    %v1447 = vsub.s32 1, %v1446
    %v1448 = vrot.slane %v1439, %v1447
    %vm1451 = vcmask 130048
    %v1453 = vsel %vm1451, %v1412, 0
    %1455 = vmatprep.subr.mxu0 0.0
    %1456 = vmatpush1.msra.mxu0 0.0
    %1457 = vmatprep.subr.mxu0 0.0
    %1458 = vmatpush1.msra.mxu0 0.0
    %1459 = vmatprep.subr.mxu0 0.0
    %1460 = vmatpush1.msra.mxu0 0.0
    %1461 = vmatprep.subr.mxu0 0.0
    %1462 = vmatpush1.msra.mxu0 0.0
    %1463 = vmatprep.subr.mxu0 0.0
    %1464 = vmatpush1.msra.mxu0 0.0
    %1465 = vmatprep.subr.mxu0 0.0
    %1466 = vmatpush1.msra.mxu0 0.0
    %1467 = vmatprep.subr.mxu0 0.0
    %1468 = vmatpush1.msra.mxu0 0.0
    %1469 = vmatprep.subr.mxu0 0.0
    %1470 = vmatpush1.msra.mxu0 0.0
    %1471 = vmatprep.subr.mxu0 0.0
    %1472 = vmatpush1.msra.mxu0 0.0
    %1473 = vmatprep.subr.mxu0 0.0
    %1474 = vmatpush1.msra.mxu0 0.0
    %1475 = vmatprep.subr.mxu0 0.0
    %1476 = vmatpush1.msra.mxu0 0.0
    %1477 = vmatprep.subr.mxu0 0.0
    %1478 = vmatpush1.msra.mxu0 0.0
    %1479 = vmatprep.subr.mxu0 0.0
    %1480 = vmatpush1.msra.mxu0 0.0
    %1481 = vmatprep.subr.mxu0 0.0
    %1482 = vmatpush1.msra.mxu0 0.0
    %1483 = vmatprep.subr.mxu0 %v1438
    %1484 = vmatpush1.msra.mxu0 %v1437
    %1485 = vmatprep.subr.mxu0 %v1436
    %1486 = vmatpush1.msra.mxu0 %v1435
    %1487 = vmatprep.subr.mxu0 0.0
    %1488 = vmatpush2.msra.mxu0 0.0
    %1489 = vmatprep.subr.mxu0 0.0
    %1490 = vmatpush2.msra.mxu0 0.0
    %1491 = vmatprep.subr.mxu0 0.0
    %1492 = vmatpush2.msra.mxu0 0.0
    %1493 = vmatprep.subr.mxu0 0.0
    %1494 = vmatpush2.msra.mxu0 0.0
    %1495 = vmatprep.subr.mxu0 0.0
    %1496 = vmatpush2.msra.mxu0 0.0
    %1497 = vmatprep.subr.mxu0 0.0
    %1498 = vmatpush2.msra.mxu0 0.0
    %1499 = vmatprep.subr.mxu0 0.0
    %1500 = vmatpush2.msra.mxu0 0.0
    %1501 = vmatprep.subr.mxu0 0.0
    %1502 = vmatpush2.msra.mxu0 0.0
    %1503 = vmatprep.subr.mxu0 0.0
    %1504 = vmatpush2.msra.mxu0 0.0
    %1505 = vmatprep.subr.mxu0 0.0
    %1506 = vmatpush2.msra.mxu0 0.0
    %1507 = vmatprep.subr.mxu0 0.0
    %1508 = vmatpush2.msra.mxu0 0.0
    %1509 = vmatprep.subr.mxu0 0.0
    %1510 = vmatpush2.msra.mxu0 0.0
    %1511 = vmatprep.subr.mxu0 0.0
    %1512 = vmatpush2.msra.mxu0 0.0
    %1513 = vmatprep.subr.mxu0 0.0
    %1514 = vmatpush2.msra.mxu0 0.0
    %1515 = vmatprep.subr.mxu0 0.0
    %1516 = vmatpush2.msra.mxu0 0.0
    %1517 = vmatprep.subr.mxu0 0.0
    %1518 = vmatpush2.msra.mxu0 0.0
    %1519 = vmatprep.mubr.f32.mxu0 0.0
    %1520 = vmatmul.mubr.f32.gmra.mxu0 %v1453
    %v1521 = vpop.f32.mrf.mxu0
    %v1522 = vadd.f32 %v1444, %v1521
    %v1523 = vpop.f32.mrf.mxu0
    %v1524 = vadd.f32 %v1448, %v1523
    %1525 = vdwg.mxu0
    %v1526 = vmax.f32 %v1522, 0.0
    %v1527 = vmax.f32 %v1524, 0.0
    %v1528 = vld [vmem:[#allocation5] sm:$0xff]
    %v1529 = vld [vmem:[#allocation5 + $0x8] sm:$0xff]
    %v1530 = vld [vmem:[#allocation5 + $0x10] sm:$0xff]
    %v1531 = vld [vmem:[#allocation5 + $0x18] sm:$0xff]
    %v1532 = vld [vmem:[#allocation5 + $0x20] sm:$0xff]
    %v1533 = vld [vmem:[#allocation5 + $0x28] sm:$0xff]
    %v1534 = vld [vmem:[#allocation5 + $0x30] sm:$0xff]
    %v1535 = vld [vmem:[#allocation5 + $0x38] sm:$0xff]
    %v1536 = vld [vmem:[#allocation5 + $0x40] sm:$0xff]
    %v1537 = vld [vmem:[#allocation5 + $0x48] sm:$0xff]
    %v1538 = vld [vmem:[#allocation5 + $0x50] sm:$0xff]
    %v1539 = vld [vmem:[#allocation5 + $0x58] sm:$0xff]
    %v1540 = vld [vmem:[#allocation5 + $0x60] sm:$0xff]
    %v1541 = vld [vmem:[#allocation5 + $0x68] sm:$0xff]
    %v1542 = vld [vmem:[#allocation5 + $0x70] sm:$0xff]
    %v1543 = vld [vmem:[#allocation5 + $0x78] sm:$0xff]
    %v1544 = vld [vmem:[#allocation5 + $0x80] sm:$0xff]
    %v1545 = vld [vmem:[#allocation5 + $0x88] sm:$0xff]
    %v1546 = vld [vmem:[#allocation5 + $0x90] sm:$0xff]
    %v1547 = vld [vmem:[#allocation5 + $0x98] sm:$0xff]
    %v1548 = vld [vmem:[#allocation5 + $0xa0] sm:$0xff]
    %v1549 = vld [vmem:[#allocation5 + $0xa8] sm:$0xff]
    %v1550 = vld [vmem:[#allocation5 + $0xb0] sm:$0xff]
    %v1551 = vld [vmem:[#allocation5 + $0xb8] sm:$0xff]
    %v1552 = vld [vmem:[#allocation5 + $0xc0] sm:$0xff]
    %v1553 = vld [vmem:[#allocation5 + $0xc8] sm:$0xff]
    %v1554 = vld [vmem:[#allocation5 + $0xd0] sm:$0xff]
    %v1555 = vld [vmem:[#allocation5 + $0xd8] sm:$0xff]
    %v1556 = vld [vmem:[#allocation5 + $0xe0] sm:$0xff]
    %v1557 = vld [vmem:[#allocation5 + $0xe8] sm:$0xff]
    %v1558 = vld [vmem:[#allocation5 + $0xf0] sm:$0xff]
    %v1559 = vld [vmem:[#allocation5 + $0xf8] sm:$0xff]
    %v1560 = vld [vmem:[%s12] sm:$0x1]
    %v1562 = vlaneseq
    %v1563 = vshrl.u32 %v1562, 7
    %v1564 = vsub.s32 0, %v1563
    %v1565 = vrot.slane %v1560, %v1564
    %1567 = vmatprep.subr.mxu0 0.0
    %1568 = vmatpush1.msra.mxu0 %v1543
    %1569 = vmatprep.subr.mxu0 0.0
    %1570 = vmatpush1.msra.mxu0 %v1542
    %1571 = vmatprep.subr.mxu0 0.0
    %1572 = vmatpush1.msra.mxu0 %v1541
    %1573 = vmatprep.subr.mxu0 0.0
    %1574 = vmatpush1.msra.mxu0 %v1540
    %1575 = vmatprep.subr.mxu0 0.0
    %1576 = vmatpush1.msra.mxu0 %v1539
    %1577 = vmatprep.subr.mxu0 0.0
    %1578 = vmatpush1.msra.mxu0 %v1538
    %1579 = vmatprep.subr.mxu0 0.0
    %1580 = vmatpush1.msra.mxu0 %v1537
    %1581 = vmatprep.subr.mxu0 0.0
    %1582 = vmatpush1.msra.mxu0 %v1536
    %1583 = vmatprep.subr.mxu0 0.0
    %1584 = vmatpush1.msra.mxu0 %v1535
    %1585 = vmatprep.subr.mxu0 0.0
    %1586 = vmatpush1.msra.mxu0 %v1534
    %1587 = vmatprep.subr.mxu0 0.0
    %1588 = vmatpush1.msra.mxu0 %v1533
    %1589 = vmatprep.subr.mxu0 0.0
    %1590 = vmatpush1.msra.mxu0 %v1532
    %1591 = vmatprep.subr.mxu0 0.0
    %1592 = vmatpush1.msra.mxu0 %v1531
    %1593 = vmatprep.subr.mxu0 0.0
    %1594 = vmatpush1.msra.mxu0 %v1530
    %1595 = vmatprep.subr.mxu0 0.0
    %1596 = vmatpush1.msra.mxu0 %v1529
    %1597 = vmatprep.subr.mxu0 0.0
    %1598 = vmatpush1.msra.mxu0 %v1528
    %1599 = vmatprep.subr.mxu0 0.0
    %1600 = vmatpush2.msra.mxu0 %v1559
    %1601 = vmatprep.subr.mxu0 0.0
    %1602 = vmatpush2.msra.mxu0 %v1558
    %1603 = vmatprep.subr.mxu0 0.0
    %1604 = vmatpush2.msra.mxu0 %v1557
    %1605 = vmatprep.subr.mxu0 0.0
    %1606 = vmatpush2.msra.mxu0 %v1556
    %1607 = vmatprep.subr.mxu0 0.0
    %1608 = vmatpush2.msra.mxu0 %v1555
    %1609 = vmatprep.subr.mxu0 0.0
    %1610 = vmatpush2.msra.mxu0 %v1554
    %1611 = vmatprep.subr.mxu0 0.0
    %1612 = vmatpush2.msra.mxu0 %v1553
    %1613 = vmatprep.subr.mxu0 0.0
    %1614 = vmatpush2.msra.mxu0 %v1552
    %1615 = vmatprep.subr.mxu0 0.0
    %1616 = vmatpush2.msra.mxu0 %v1551
    %1617 = vmatprep.subr.mxu0 0.0
    %1618 = vmatpush2.msra.mxu0 %v1550
    %1619 = vmatprep.subr.mxu0 0.0
    %1620 = vmatpush2.msra.mxu0 %v1549
    %1621 = vmatprep.subr.mxu0 0.0
    %1622 = vmatpush2.msra.mxu0 %v1548
    %1623 = vmatprep.subr.mxu0 0.0
    %1624 = vmatpush2.msra.mxu0 %v1547
    %1625 = vmatprep.subr.mxu0 0.0
    %1626 = vmatpush2.msra.mxu0 %v1546
    %1627 = vmatprep.subr.mxu0 0.0
    %1628 = vmatpush2.msra.mxu0 %v1545
    %1629 = vmatprep.subr.mxu0 0.0
    %1630 = vmatpush2.msra.mxu0 %v1544
    %1631 = vmatprep.mubr.f32.mxu0 %v1527
    %1632 = vmatmul.mubr.f32.gmra.mxu0 %v1526
    %v1633 = vpop.f32.mrf.mxu0
    %v1634 = vadd.f32 %v1565, %v1633
    %v1635 = vpop.f32.mrf.mxu0
    %1636 = vdwg.mxu0
    %v1637 = vld [vmem:[%s13] sm:$0x1]
    %v1638 = vld [vmem:[%s13 + $0x1] sm:$0x1]
    %v1639 = vld [vmem:[%s13 + $0x2] sm:$0x1]
    %v1640 = vld [vmem:[%s13 + $0x3] sm:$0x1]
    %v1641 = vlaneseq
    %v1642 = vshrl.u32 %v1641, 7
    %v1643 = vsub.s32 0, %v1642
    %v1644 = vrot.slane %v1637, %v1643
    %v1645 = vmul.f32 %v1644, 0.0
    %v1646 = vadd.f32 %v1634, %v1645
    %v1647 = vlaneseq
    %v1648 = vshrl.u32 %v1647, 7
    %v1649 = vsub.s32 0, %v1648
    %v1650 = vrot.slane %v1638, %v1649
    %v1651 = vmul.f32 %v1650, 0.0
    %v1652 = vadd.f32 %v1646, %v1651
    %v1653 = vlaneseq
    %v1654 = vshrl.u32 %v1653, 7
    %v1655 = vsub.s32 0, %v1654
    %v1656 = vrot.slane %v1639, %v1655
    %v1657 = vmul.f32 %v1656, 0.0
    %v1658 = vadd.f32 %v1652, %v1657
    %v1659 = vlaneseq
    %v1660 = vshrl.u32 %v1659, 7
    %v1661 = vsub.s32 0, %v1660
    %v1662 = vrot.slane %v1640, %v1661
    %v1663 = vmul.f32 %v1662, 0.0
    %v1664 = vadd.f32 %v1658, %v1663
    %v1665 = vxor.u32 %v1664, 2147483648
    %v1666 = vmul.f32 %v1665, 1.442695
    %v1667 = vpow.pop %v1666
    %v1668 = vadd.f32 %v1667, 1.0
    %v1669 = vrcp.pop %v1668
    %v1670 = vmul.f32 1.0, %v1669
    %v1671 = vtanh.pop %v1664
    %v1672 = vmul.f32 %v1670, 0.0
    %1674 = vrot.lane.b32.xlu0 %v1671, 116
    %v1675 = vpop.permute.xlu0 %1674
    %v1677 = vmul.f32 %v1670, %v1675
    %1679 = vrot.lane.b32.xlu0 %v1677, 4
    %v1680 = vpop.permute.xlu0 %1679
    %v1682 = vadd.f32 %v1672, %v1680
    %v1683 = vtanh.pop %v1682
    %1685 = vrot.lane.b32.xlu0 %v1683, 4
    %v1686 = vpop.permute.xlu0 %1685
    %v1688 = vmul.f32 %v1670, %v1686
    %1690 = vset.pattern.permute.xlu0 8
    %1691 = vperm.xlu0 %1690, %v1688
    %v1692 = vpop.permute.xlu0 %1691
    %v1694 = vmul.f32 %v1692, %v1644
    %1696 = vrot.lane.b32.xlu0 %v1694, 16
    %v1697 = vpop.permute.xlu0 %1696
    %v1699 = vadd.f32 %v1634, %v1697
    %1700 = vset.pattern.permute.xlu0 9
    %1701 = vperm.xlu0 %1700, %v1688
    %v1702 = vpop.permute.xlu0 %1701
    %v1704 = vmul.f32 %v1702, %v1650
    %1706 = vrot.lane.b32.xlu0 %v1704, 16
    %v1707 = vpop.permute.xlu0 %1706
    %v1709 = vadd.f32 %v1699, %v1707
    %1710 = vset.pattern.permute.xlu0 10
    %1711 = vperm.xlu0 %1710, %v1688
    %v1712 = vpop.permute.xlu0 %1711
    %v1714 = vmul.f32 %v1712, %v1656
    %1716 = vrot.lane.b32.xlu0 %v1714, 16
    %v1717 = vpop.permute.xlu0 %1716
    %v1719 = vadd.f32 %v1709, %v1717
    %1720 = vset.pattern.permute.xlu0 11
    %1721 = vperm.xlu0 %1720, %v1688
    %v1722 = vpop.permute.xlu0 %1721
    %v1724 = vmul.f32 %v1722, %v1662
    %1726 = vrot.lane.b32.xlu0 %v1724, 16
    %v1727 = vpop.permute.xlu0 %1726
    %v1729 = vadd.f32 %v1719, %v1727
    %v1730 = vxor.u32 %v1729, 2147483648
    %v1731 = vmul.f32 %v1730, 1.442695
    %v1732 = vpow.pop %v1731
    %v1733 = vadd.f32 %v1732, 1.0
    %v1734 = vrcp.pop %v1733
    %v1735 = vmul.f32 1.0, %v1734
    %v1736 = vtanh.pop %v1729
    %1738 = vrot.lane.b32.xlu0 %v1682, 16
    %v1739 = vpop.permute.xlu0 %1738
    %v1741 = vmul.f32 %v1735, %v1739
    %1743 = vrot.lane.b32.xlu0 %v1736, 116
    %v1744 = vpop.permute.xlu0 %1743
    %v1746 = vmul.f32 %v1735, %v1744
    %1748 = vrot.lane.b32.xlu0 %v1746, 4
    %v1749 = vpop.permute.xlu0 %1748
    %v1751 = vadd.f32 %v1741, %v1749
    %v1752 = vtanh.pop %v1751
    %1754 = vrot.lane.b32.xlu0 %v1752, 4
    %v1755 = vpop.permute.xlu0 %1754
    %v1757 = vmul.f32 %v1735, %v1755
    %1759 = vset.pattern.permute.xlu0 24
    %1760 = vperm.xlu0 %1759, %v1757
    %v1761 = vpop.permute.xlu0 %1760
    %v1763 = vmul.f32 %v1761, %v1644
    %1765 = vrot.lane.b32.xlu0 %v1763, 32
    %v1766 = vpop.permute.xlu0 %1765
    %v1768 = vadd.f32 %v1634, %v1766
    %1769 = vset.pattern.permute.xlu0 25
    %1770 = vperm.xlu0 %1769, %v1757
    %v1771 = vpop.permute.xlu0 %1770
    %v1773 = vmul.f32 %v1771, %v1650
    %1775 = vrot.lane.b32.xlu0 %v1773, 32
    %v1776 = vpop.permute.xlu0 %1775
    %v1778 = vadd.f32 %v1768, %v1776
    %1779 = vset.pattern.permute.xlu0 26
    %1780 = vperm.xlu0 %1779, %v1757
    %v1781 = vpop.permute.xlu0 %1780
    %v1783 = vmul.f32 %v1781, %v1656
    %1785 = vrot.lane.b32.xlu0 %v1783, 32
    %v1786 = vpop.permute.xlu0 %1785
    %v1788 = vadd.f32 %v1778, %v1786
    %1789 = vset.pattern.permute.xlu0 27
    %1790 = vperm.xlu0 %1789, %v1757
    %v1791 = vpop.permute.xlu0 %1790
    %v1793 = vmul.f32 %v1791, %v1662
    %1795 = vrot.lane.b32.xlu0 %v1793, 32
    %v1796 = vpop.permute.xlu0 %1795
    %v1798 = vadd.f32 %v1788, %v1796
    %v1799 = vxor.u32 %v1798, 2147483648
    %v1800 = vmul.f32 %v1799, 1.442695
    %v1801 = vpow.pop %v1800
    %v1802 = vadd.f32 %v1801, 1.0
    %v1803 = vrcp.pop %v1802
    %v1804 = vmul.f32 1.0, %v1803
    %v1805 = vtanh.pop %v1798
    %1807 = vrot.lane.b32.xlu0 %v1751, 16
    %v1808 = vpop.permute.xlu0 %1807
    %v1810 = vmul.f32 %v1804, %v1808
    %1812 = vrot.lane.b32.xlu0 %v1805, 116
    %v1813 = vpop.permute.xlu0 %1812
    %v1815 = vmul.f32 %v1804, %v1813
    %1817 = vrot.lane.b32.xlu0 %v1815, 4
    %v1818 = vpop.permute.xlu0 %1817
    %v1820 = vadd.f32 %v1810, %v1818
    %v1821 = vtanh.pop %v1820
    %1823 = vrot.lane.b32.xlu0 %v1821, 4
    %v1824 = vpop.permute.xlu0 %1823
    %v1826 = vmul.f32 %v1804, %v1824
    %1828 = vset.pattern.permute.xlu0 40
    %1829 = vperm.xlu0 %1828, %v1826
    %v1830 = vpop.permute.xlu0 %1829
    %v1832 = vmul.f32 %v1830, %v1644
    %1834 = vrot.lane.b32.xlu0 %v1832, 48
    %v1835 = vpop.permute.xlu0 %1834
    %v1837 = vadd.f32 %v1634, %v1835
    %1838 = vset.pattern.permute.xlu0 41
    %1839 = vperm.xlu0 %1838, %v1826
    %v1840 = vpop.permute.xlu0 %1839
    %v1842 = vmul.f32 %v1840, %v1650
    %1844 = vrot.lane.b32.xlu0 %v1842, 48
    %v1845 = vpop.permute.xlu0 %1844
    %v1847 = vadd.f32 %v1837, %v1845
    %1848 = vset.pattern.permute.xlu0 42
    %1849 = vperm.xlu0 %1848, %v1826
    %v1850 = vpop.permute.xlu0 %1849
    %v1852 = vmul.f32 %v1850, %v1656
    %1854 = vrot.lane.b32.xlu0 %v1852, 48
    %v1855 = vpop.permute.xlu0 %1854
    %v1857 = vadd.f32 %v1847, %v1855
    %1858 = vset.pattern.permute.xlu0 43
    %1859 = vperm.xlu0 %1858, %v1826
    %v1860 = vpop.permute.xlu0 %1859
    %v1862 = vmul.f32 %v1860, %v1662
    %1864 = vrot.lane.b32.xlu0 %v1862, 48
    %v1865 = vpop.permute.xlu0 %1864
    %v1867 = vadd.f32 %v1857, %v1865
    %v1868 = vxor.u32 %v1867, 2147483648
    %v1869 = vmul.f32 %v1868, 1.442695
    %v1870 = vpow.pop %v1869
    %v1871 = vadd.f32 %v1870, 1.0
    %v1872 = vrcp.pop %v1871
    %v1873 = vmul.f32 1.0, %v1872
    %v1874 = vtanh.pop %v1867
    %1876 = vrot.lane.b32.xlu0 %v1820, 16
    %v1877 = vpop.permute.xlu0 %1876
    %v1879 = vmul.f32 %v1873, %v1877
    %1881 = vrot.lane.b32.xlu0 %v1874, 116
    %v1882 = vpop.permute.xlu0 %1881
    %v1884 = vmul.f32 %v1873, %v1882
    %1886 = vrot.lane.b32.xlu0 %v1884, 4
    %v1887 = vpop.permute.xlu0 %1886
    %v1889 = vadd.f32 %v1879, %v1887
    %v1890 = vtanh.pop %v1889
    %1892 = vrot.lane.b32.xlu0 %v1890, 4
    %v1893 = vpop.permute.xlu0 %1892
    %v1895 = vmul.f32 %v1873, %v1893
    %1897 = vset.pattern.permute.xlu0 56
    %1898 = vperm.xlu0 %1897, %v1895
    %v1899 = vpop.permute.xlu0 %1898
    %v1901 = vmul.f32 %v1899, %v1644
    %1903 = vrot.lane.b32.xlu0 %v1901, 64
    %v1904 = vpop.permute.xlu0 %1903
    %v1906 = vadd.f32 %v1634, %v1904
    %1907 = vset.pattern.permute.xlu0 57
    %1908 = vperm.xlu0 %1907, %v1895
    %v1909 = vpop.permute.xlu0 %1908
    %v1911 = vmul.f32 %v1909, %v1650
    %1913 = vrot.lane.b32.xlu0 %v1911, 64
    %v1914 = vpop.permute.xlu0 %1913
    %v1916 = vadd.f32 %v1906, %v1914
    %1917 = vset.pattern.permute.xlu0 58
    %1918 = vperm.xlu0 %1917, %v1895
    %v1919 = vpop.permute.xlu0 %1918
    %v1921 = vmul.f32 %v1919, %v1656
    %1923 = vrot.lane.b32.xlu0 %v1921, 64
    %v1924 = vpop.permute.xlu0 %1923
    %v1926 = vadd.f32 %v1916, %v1924
    %1927 = vset.pattern.permute.xlu0 59
    %1928 = vperm.xlu0 %1927, %v1895
    %v1929 = vpop.permute.xlu0 %1928
    %v1931 = vmul.f32 %v1929, %v1662
    %1933 = vrot.lane.b32.xlu0 %v1931, 64
    %v1934 = vpop.permute.xlu0 %1933
    %v1936 = vadd.f32 %v1926, %v1934
    %v1937 = vxor.u32 %v1936, 2147483648
    %v1938 = vmul.f32 %v1937, 1.442695
    %v1939 = vpow.pop %v1938
    %v1940 = vadd.f32 %v1939, 1.0
    %v1941 = vrcp.pop %v1940
    %v1942 = vmul.f32 1.0, %v1941
    %v1943 = vtanh.pop %v1936
    %1945 = vrot.lane.b32.xlu0 %v1889, 16
    %v1946 = vpop.permute.xlu0 %1945
    %v1948 = vmul.f32 %v1942, %v1946
    %1950 = vrot.lane.b32.xlu0 %v1943, 116
    %v1951 = vpop.permute.xlu0 %1950
    %v1953 = vmul.f32 %v1942, %v1951
    %1955 = vrot.lane.b32.xlu0 %v1953, 4
    %v1956 = vpop.permute.xlu0 %1955
    %v1958 = vadd.f32 %v1948, %v1956
    %v1959 = vtanh.pop %v1958
    %1961 = vrot.lane.b32.xlu0 %v1959, 4
    %v1962 = vpop.permute.xlu0 %1961
    %v1964 = vmul.f32 %v1942, %v1962
    %1966 = vset.pattern.permute.xlu0 72
    %1967 = vperm.xlu0 %1966, %v1964
    %v1968 = vpop.permute.xlu0 %1967
    %v1970 = vmul.f32 %v1968, %v1644
    %1972 = vrot.lane.b32.xlu0 %v1970, 80
    %v1973 = vpop.permute.xlu0 %1972
    %v1975 = vadd.f32 %v1634, %v1973
    %1976 = vset.pattern.permute.xlu0 73
    %1977 = vperm.xlu0 %1976, %v1964
    %v1978 = vpop.permute.xlu0 %1977
    %v1980 = vmul.f32 %v1978, %v1650
    %1982 = vrot.lane.b32.xlu0 %v1980, 80
    %v1983 = vpop.permute.xlu0 %1982
    %v1985 = vadd.f32 %v1975, %v1983
    %1986 = vset.pattern.permute.xlu0 74
    %1987 = vperm.xlu0 %1986, %v1964
    %v1988 = vpop.permute.xlu0 %1987
    %v1990 = vmul.f32 %v1988, %v1656
    %1992 = vrot.lane.b32.xlu0 %v1990, 80
    %v1993 = vpop.permute.xlu0 %1992
    %v1995 = vadd.f32 %v1985, %v1993
    %1996 = vset.pattern.permute.xlu0 75
    %1997 = vperm.xlu0 %1996, %v1964
    %v1998 = vpop.permute.xlu0 %1997
    %v2000 = vmul.f32 %v1998, %v1662
    %2002 = vrot.lane.b32.xlu0 %v2000, 80
    %v2003 = vpop.permute.xlu0 %2002
    %v2005 = vadd.f32 %v1995, %v2003
    %v2006 = vxor.u32 %v2005, 2147483648
    %v2007 = vmul.f32 %v2006, 1.442695
    %v2008 = vpow.pop %v2007
    %v2009 = vadd.f32 %v2008, 1.0
    %v2010 = vrcp.pop %v2009
    %v2011 = vmul.f32 1.0, %v2010
    %v2012 = vtanh.pop %v2005
    %2014 = vrot.lane.b32.xlu0 %v1958, 16
    %v2015 = vpop.permute.xlu0 %2014
    %v2017 = vmul.f32 %v2011, %v2015
    %2019 = vrot.lane.b32.xlu0 %v2012, 116
    %v2020 = vpop.permute.xlu0 %2019
    %v2022 = vmul.f32 %v2011, %v2020
    %2024 = vrot.lane.b32.xlu0 %v2022, 4
    %v2025 = vpop.permute.xlu0 %2024
    %v2027 = vadd.f32 %v2017, %v2025
    %v2028 = vtanh.pop %v2027
    %2030 = vrot.lane.b32.xlu0 %v2028, 4
    %v2031 = vpop.permute.xlu0 %2030
    %v2033 = vmul.f32 %v2011, %v2031
    %2035 = vset.pattern.permute.xlu0 88
    %2036 = vperm.xlu0 %2035, %v2033
    %v2037 = vpop.permute.xlu0 %2036
    %v2039 = vmul.f32 %v2037, %v1644
    %2041 = vrot.lane.b32.xlu0 %v2039, 96
    %v2042 = vpop.permute.xlu0 %2041
    %v2044 = vadd.f32 %v1634, %v2042
    %2045 = vset.pattern.permute.xlu0 89
    %2046 = vperm.xlu0 %2045, %v2033
    %v2047 = vpop.permute.xlu0 %2046
    %v2049 = vmul.f32 %v2047, %v1650
    %2051 = vrot.lane.b32.xlu0 %v2049, 96
    %v2052 = vpop.permute.xlu0 %2051
    %v2054 = vadd.f32 %v2044, %v2052
    %2055 = vset.pattern.permute.xlu0 90
    %2056 = vperm.xlu0 %2055, %v2033
    %v2057 = vpop.permute.xlu0 %2056
    %v2059 = vmul.f32 %v2057, %v1656
    %2061 = vrot.lane.b32.xlu0 %v2059, 96
    %v2062 = vpop.permute.xlu0 %2061
    %v2064 = vadd.f32 %v2054, %v2062
    %2065 = vset.pattern.permute.xlu0 91
    %2066 = vperm.xlu0 %2065, %v2033
    %v2067 = vpop.permute.xlu0 %2066
    %v2069 = vmul.f32 %v2067, %v1662
    %2071 = vrot.lane.b32.xlu0 %v2069, 96
    %v2072 = vpop.permute.xlu0 %2071
    %v2074 = vadd.f32 %v2064, %v2072
    %v2075 = vxor.u32 %v2074, 2147483648
    %v2076 = vmul.f32 %v2075, 1.442695
    %v2077 = vpow.pop %v2076
    %v2078 = vadd.f32 %v2077, 1.0
    %v2079 = vrcp.pop %v2078
    %v2080 = vmul.f32 1.0, %v2079
    %v2081 = vtanh.pop %v2074
    %2083 = vrot.lane.b32.xlu0 %v2027, 16
    %v2084 = vpop.permute.xlu0 %2083
    %v2086 = vmul.f32 %v2080, %v2084
    %2088 = vrot.lane.b32.xlu0 %v2081, 116
    %v2089 = vpop.permute.xlu0 %2088
    %v2091 = vmul.f32 %v2080, %v2089
    %2093 = vrot.lane.b32.xlu0 %v2091, 4
    %v2094 = vpop.permute.xlu0 %2093
    %v2096 = vadd.f32 %v2086, %v2094
    %v2097 = vtanh.pop %v2096
    %2099 = vrot.lane.b32.xlu0 %v2097, 4
    %v2100 = vpop.permute.xlu0 %2099
    %v2102 = vmul.f32 %v2080, %v2100
    %2104 = vset.pattern.permute.xlu0 104
    %2105 = vperm.xlu0 %2104, %v2102
    %v2106 = vpop.permute.xlu0 %2105
    %v2108 = vmul.f32 %v2106, %v1644
    %2110 = vrot.lane.b32.xlu0 %v2108, 112
    %v2111 = vpop.permute.xlu0 %2110
    %v2113 = vadd.f32 %v1634, %v2111
    %2114 = vset.pattern.permute.xlu0 105
    %2115 = vperm.xlu0 %2114, %v2102
    %v2116 = vpop.permute.xlu0 %2115
    %v2118 = vmul.f32 %v2116, %v1650
    %2120 = vrot.lane.b32.xlu0 %v2118, 112
    %v2121 = vpop.permute.xlu0 %2120
    %v2123 = vadd.f32 %v2113, %v2121
    %2124 = vset.pattern.permute.xlu0 106
    %2125 = vperm.xlu0 %2124, %v2102
    %v2126 = vpop.permute.xlu0 %2125
    %v2128 = vmul.f32 %v2126, %v1656
    %2130 = vrot.lane.b32.xlu0 %v2128, 112
    %v2131 = vpop.permute.xlu0 %2130
    %v2133 = vadd.f32 %v2123, %v2131
    %2134 = vset.pattern.permute.xlu0 107
    %2135 = vperm.xlu0 %2134, %v2102
    %v2136 = vpop.permute.xlu0 %2135
    %v2138 = vmul.f32 %v2136, %v1662
    %2140 = vrot.lane.b32.xlu0 %v2138, 112
    %v2141 = vpop.permute.xlu0 %2140
    %v2143 = vadd.f32 %v2133, %v2141
    %v2144 = vxor.u32 %v2143, 2147483648
    %v2145 = vmul.f32 %v2144, 1.442695
    %v2146 = vpow.pop %v2145
    %v2147 = vadd.f32 %v2146, 1.0
    %v2148 = vrcp.pop %v2147
    %v2149 = vmul.f32 1.0, %v2148
    %v2150 = vtanh.pop %v2143
    %2152 = vrot.lane.b32.xlu0 %v2096, 16
    %v2153 = vpop.permute.xlu0 %2152
    %v2155 = vmul.f32 %v2149, %v2153
    %2157 = vrot.lane.b32.xlu0 %v2150, 116
    %v2158 = vpop.permute.xlu0 %2157
    %v2160 = vmul.f32 %v2149, %v2158
    %2162 = vrot.lane.b32.xlu0 %v2160, 4
    %v2163 = vpop.permute.xlu0 %2162
    %v2165 = vadd.f32 %v2155, %v2163
    %v2166 = vtanh.pop %v2165
    %2168 = vrot.lane.b32.xlu0 %v2166, 4
    %v2169 = vpop.permute.xlu0 %2168
    %v2171 = vmul.f32 %v2149, %v2169
    %2172 = vrot.lane.b32.xlu0 %v1688, 120
    %v2173 = vpop.permute.xlu0 %2172
    %2175 = vrot.lane.b32.xlu0 %v1757, 108
    %v2176 = vpop.permute.xlu0 %2175
    %2178 = vrot.lane.b32.xlu0 %v1826, 96
    %v2179 = vpop.permute.xlu0 %2178
    %2181 = vrot.lane.b32.xlu0 %v1895, 84
    %v2182 = vpop.permute.xlu0 %2181
    %2184 = vrot.lane.b32.xlu0 %v1964, 72
    %v2185 = vpop.permute.xlu0 %2184
    %2187 = vrot.lane.b32.xlu0 %v2033, 60
    %v2188 = vpop.permute.xlu0 %2187
    %2190 = vrot.lane.b32.xlu0 %v2102, 48
    %v2191 = vpop.permute.xlu0 %2190
    %2194 = vrot.lane.b32.xlu0 %v2171, 36
    %v2195 = vpop.permute.xlu0 %2194
    %vm2197 = vcmask 31744
    %v2198 = vsel %vm2197, %v2173, %v2176
    %vm2199 = vcmask 64512
    %v2200 = vsel %vm2199, %v2198, %v2179
    %vm2201 = vcmask 97280
    %v2202 = vsel %vm2201, %v2200, %v2182
    %v2203 = vsel %vm1451, %v2202, %v2185
    %vm2204 = vcmask 162816
    %v2205 = vsel %vm2204, %v2203, %v2188
    %vm2206 = vcmask 195584
    %v2207 = vsel %vm2206, %v2205, %v2191
    %vm2208 = vcmask 228352
    %v2209 = vsel %vm2208, %v2207, %v2195
    %v2210 = vxor.u32 %v2209, 2147483648
    %v2211 = vmul.f32 %v2210, 1.442695
    %v2212 = vpow.pop %v2211
    %v2213 = vadd.f32 %v2212, 1.0
    %v2214 = vrcp.pop %v2213
    %v2215 = vmul.f32 1.0, %v2214
    %vm2216 = vcmask 254976
    %2217 = vst.msk [vmem:[%s14] sm:$0x3] %vm2216, %v2215
    // Predicated region
    $region66: #{recurrent_vae_forward.1} parent=1 // pred_check
      _
    $region67: #{recurrent_vae_forward.1} parent=1 // pred_check_branch
      %2219 = sbr.rel (0) target = $region69
    $region68: #{recurrent_vae_forward.1} parent=1 // pred_region
      _
    $region69: #{recurrent_vae_forward.1} parent=1 // pred_fallthru
      _
    // Predicated region
    $region70: #{recurrent_vae_forward.1} parent=1 // pred_check
      _
    $region71: #{recurrent_vae_forward.1} parent=1 // pred_check_branch
      %2221 = sbr.rel (0) target = $region73
    $region72: #{recurrent_vae_forward.1} parent=1 // pred_region
      %s2223 = ssub.s32 16, 16
      %2224 = vsyncadd [#allocation4], %s2223
      %s2226 = sshll.u32 [#allocation7], 4
      %s2227 = int_to_ptr.vmem [resolvable:$true] %s2226
      %2229 = dma.vmem_to_hbm [thread:$0]  %s2227, 16, %s15, [#allocation4]
    $region73: #{recurrent_vae_forward.1} parent=1 // pred_fallthru
      _
    // Predicated region
    $region74: #{recurrent_vae_forward.1} parent=1 // pred_check
      _
    $region75: #{recurrent_vae_forward.1} parent=1 // pred_check_branch
      %2231 = sbr.rel (0) target = $region77
    $region76: #{recurrent_vae_forward.1} parent=1 // pred_region
      _
    $region77: #{recurrent_vae_forward.1} parent=1 // pred_fallthru
      _
    // Predicated region
    $region78: #{recurrent_vae_forward.1} parent=1 // pred_check
      _
    $region79: #{recurrent_vae_forward.1} parent=1 // pred_check_branch
      %2233 = sbr.rel (0) target = $region81
    $region80: #{recurrent_vae_forward.1} parent=1 // pred_region
      %2234 = dma.done [#allocation4], 16
    $region81: #{recurrent_vae_forward.1} parent=1 // pred_fallthru
      _
    %2235 = vsyncpa [#allocation3], 1
    %2236 = vsyncpa [#allocation6], 1
    %2237 = vsyncpa [#allocation4], 1

</llo_original>
